<compile_context>
chip_gen: v7x
topology: tpu7x:2x2x1
jax: 0.10.0
libtpu: 0.0.40
codegen_flags: <defaults>
</compile_context>

<pallas_src>
import jax
import jax.numpy as jnp
from jax import lax
from jax.experimental import pallas as pl
from jax.experimental.pallas import tpu as pltpu


def _round_up(x, m):
    return (x + m - 1) // m * m


# ---------------- fused LSTM recurrence + attention + fc kernel --------------
def lstm_attn_kernel(lens_ref, x_ref, wih_ref, bias_ref, whh_ref,
                     wcomb_ref, bcomb_ref, out_ref, gx_scr, h_scr, c_scr):
    # lens_ref : (TB, 1)  int32          x_ref    : (T_CHUNK, TB, Ep) bf16
    # wih_ref  : (Ep, 4Hp) bf16          bias_ref : (1, 4Hp) f32
    # whh_ref  : (Hp, 4Hp) bf16          wcomb_ref: (Hp, Pp) f32
    # bcomb_ref: (1, Pp) f32             out_ref  : (TB, Pp) f32
    # gx_scr   : (T_CHUNK, TB, 4Hp) f32  h_scr/c_scr : (TB, Hp) f32
    t_blk = pl.program_id(1)
    n_blk = pl.num_programs(1)
    T_CHUNK, TB, Ep = x_ref.shape
    Hp = h_scr.shape[1]
    G = 4 * Hp

    @pl.when(t_blk == 0)
    def _init():
        h_scr[...] = jnp.zeros_like(h_scr)
        c_scr[...] = jnp.zeros_like(c_scr)

    # Input projection for the whole chunk in one MXU pass, hoisted out of the
    # serial recurrence; result stays in VMEM scratch (no HBM round-trip).
    x2d = x_ref[...].reshape(T_CHUNK * TB, Ep)          # TB % 8 == 0 -> free reshape
    gx = jnp.dot(x2d, wih_ref[...], preferred_element_type=jnp.float32)
    gx_scr[...] = (gx + bias_ref[...]).reshape(T_CHUNK, TB, G)

    whh = whh_ref[...]                                   # hoisted: once per chunk
    lens_b = jnp.broadcast_to(lens_ref[...], (TB, Hp))   # hoisted mask broadcast
    t0 = t_blk * T_CHUNK

    def step(j, carry):
        h, c = carry
        gates = gx_scr[j] + jnp.dot(h.astype(jnp.bfloat16), whh,
                                    preferred_element_type=jnp.float32)  # (TB,4Hp)
        # gate slices are lane-aligned (Hp % 128 == 0), torch order (i, f, g, o)
        i_g = jax.nn.sigmoid(gates[:, 0 * Hp:1 * Hp])
        f_g = jax.nn.sigmoid(gates[:, 1 * Hp:2 * Hp])
        g_g = jnp.tanh(gates[:, 2 * Hp:3 * Hp])
        o_g = jax.nn.sigmoid(gates[:, 3 * Hp:4 * Hp])
        c_new = f_g * c + i_g * g_g
        h_new = o_g * jnp.tanh(c_new)
        # packed-sequence semantics: state frozen once t >= text_len[b]
        m = (t0 + j) < lens_b
        return jnp.where(m, h_new, h), jnp.where(m, c_new, c)

    h, c = lax.fori_loop(0, T_CHUNK, step, (h_scr[...], c_scr[...]),
                         unroll=min(T_CHUNK, 8))         # capped unroll
    h_scr[...] = h
    c_scr[...] = c

    @pl.when(t_blk == n_blk - 1)
    def _epilogue():
        # Attention(H, out_dim=H, n_head=8, score='mlp') with k_len==q_len==1:
        # softmax over the single key position is exactly 1, so the attended
        # output equals proj(w_k(h_n)); w_k/proj/fc were pre-folded in the glue
        # into one (Hp, Pp) matmul.  Lane-dense (Pp = multiple of 128) store.
        out_ref[...] = (jnp.dot(h_scr[...], wcomb_ref[...],
                                preferred_element_type=jnp.float32)
                        + bcomb_ref[...])


# ------------------------------- glue helpers --------------------------------
def _pack_gate_matrix(w, H, in_dim, Hp, in_pad):
    # torch LSTM weight (4H, in_dim), gate order (i, f, g, o)
    #   -> (in_pad, 4*Hp), each gate occupying a lane-aligned Hp-wide block.
    w4 = jnp.transpose(w.reshape(4, H, in_dim), (0, 2, 1))        # (4, in, H)
    w4 = jnp.pad(w4, ((0, 0), (0, in_pad - in_dim), (0, Hp - H)))
    return jnp.concatenate([w4[k] for k in range(4)], axis=1)     # (in_pad, 4*Hp)


def _pack_gate_bias(b, H, Hp):
    return jnp.pad(b.reshape(4, H), ((0, 0), (0, Hp - H))).reshape(1, 4 * Hp)


def _vmem_need_bytes(t_chunk, TB, Ep, Hp, Pp):
    # Explicit buffer math for the fused kernel's VMEM working set.
    G = 4 * Hp
    streamed = 2 * t_chunk * TB * Ep * 2                   # x chunk, 2 bufs, bf16
    weights = (2 * (Ep + Hp) * G * 2                       # W_ih + W_hh (bf16, 2 bufs)
               + 2 * G * 4 + 2 * (Hp + 1) * Pp * 4)        # bias + folded epilogue
    io_bufs = 2 * TB * 128 * 4 + 2 * TB * Pp * 4           # lens (lane-padded) + out
    scratch = t_chunk * TB * G * 4 + 2 * TB * Hp * 4       # gx + h + c
    return streamed + weights + io_bufs + scratch


def make_params(key, vocab, embed_dim, hidden_dim, polarities_dim, n_head=8):
    ks = jax.random.split(key, 16)
    s = 0.1
    H, E, P = hidden_dim, embed_dim, polarities_dim
    hd = H // n_head
    return {
        "embedding": jax.random.normal(ks[0], (vocab, E), jnp.float32) * s,
        # nn.LSTM (torch layout): weight_ih (4H,E), weight_hh (4H,H), biases (4H,)
        "w_ih": jax.random.normal(ks[1], (4 * H, E), jnp.float32) * s,
        "w_hh": jax.random.normal(ks[2], (4 * H, H), jnp.float32) * s,
        "b_ih": jax.random.normal(ks[3], (4 * H,), jnp.float32) * s,
        "b_hh": jax.random.normal(ks[4], (4 * H,), jnp.float32) * s,
        # Attention: w_k/w_q Linear(H, n_head*hd = H), proj Linear(H, H), mlp weight
        "w_k": jax.random.normal(ks[5], (H, H), jnp.float32) * s,
        "b_k": jax.random.normal(ks[6], (H,), jnp.float32) * s,
        "w_q": jax.random.normal(ks[7], (H, H), jnp.float32) * s,    # inert (k_len==1)
        "b_q": jax.random.normal(ks[8], (H,), jnp.float32) * s,      # inert
        "w_attn": jax.random.normal(ks[9], (2 * hd,), jnp.float32) * s,  # inert
        "w_proj": jax.random.normal(ks[10], (H, H), jnp.float32) * s,
        "b_proj": jax.random.normal(ks[11], (H,), jnp.float32) * s,
        # fc: Linear(H, P)
        "w_fc": jax.random.normal(ks[12], (P, H), jnp.float32) * s,
        "b_fc": jax.random.normal(ks[13], (P,), jnp.float32) * s,
    }


def lstm_attn_forward(text_indices, params, t_chunk=16,
                      split_batch_for_megacore=True):
    B, L = text_indices.shape
    emb = params["embedding"]
    E = emb.shape[1]
    H = params["w_hh"].shape[1]
    P = params["w_fc"].shape[0]

    # lane/sublane-aligned padded sizes
    Hp = _round_up(H, 128)
    Ep = _round_up(E, 128)
    Pp = _round_up(P, 128)
    G = 4 * Hp

    # Batch tiling.  Leading grid axis is 'parallel': on v7x (2 TensorCores)
    # it only shards work when there are >= 2 tiles, so split mid-size batches
    # in two.  Tiny batches (and v5e, via split_batch_for_megacore=False) keep
    # a single tile to avoid extra serial grid steps.
    B8 = _round_up(B, 8)
    if B8 > 256:
        TB = 128
    elif split_batch_for_megacore and B8 >= 16:
        TB = _round_up((B8 + 1) // 2, 8)
    else:
        TB = B8
    B_tot = _round_up(B8, TB)
    NB = B_tot // TB

    # Time chunking: largest chunk whose fused working set keeps >=2x headroom
    # under v7x's 64 MiB VMEM (v5e/v6e have 128 MiB and fit trivially).
    T_CHUNK = max(1, min(t_chunk, L))
    while T_CHUNK > 4 and _vmem_need_bytes(T_CHUNK, TB, Ep, Hp, Pp) > 24 * 2 ** 20:
        T_CHUNK //= 2
    L_pad = _round_up(L, T_CHUNK)
    NT = L_pad // T_CHUNK
    vmem_limit = int(min(max(2 * _vmem_need_bytes(T_CHUNK, TB, Ep, Hp, Pp),
                             16 * 2 ** 20), 56 * 2 ** 20))

    # ---- glue: text_len, embedding gather, time-major padded layout --------
    lens = jnp.sum(text_indices != 0, axis=-1).astype(jnp.int32)          # (B,)
    lens_p = jnp.pad(lens, (0, B_tot - B)).reshape(B_tot, 1)

    x = emb[text_indices]                                                 # (B, L, E)
    x = jnp.transpose(x, (1, 0, 2))                                       # (L, B, E)
    x = jnp.pad(x, ((0, L_pad - L), (0, B_tot - B), (0, Ep - E)))
    x = x.astype(jnp.bfloat16)                                            # streamed

    # ---- glue: pre-transposed, zero-padded, lane-aligned weights -----------
    wih_p = _pack_gate_matrix(params["w_ih"], H, E, Hp, Ep).astype(jnp.bfloat16)
    whh_p = _pack_gate_matrix(params["w_hh"], H, H, Hp, Hp).astype(jnp.bfloat16)
    bias_p = _pack_gate_bias(params["b_ih"] + params["b_hh"], H, Hp)

    # Fold w_k -> proj -> fc into one matmul.  Valid because with k_len==q_len==1
    # the Attention softmax is exactly 1, so the attended output is proj(w_k(h_n)).
    w_comb = params["w_k"].T @ params["w_proj"].T @ params["w_fc"].T       # (H, P)
    b_comb = ((params["b_k"] @ params["w_proj"].T + params["b_proj"])
              @ params["w_fc"].T + params["b_fc"])                         # (P,)
    wcomb_p = jnp.pad(w_comb, ((0, Hp - H), (0, Pp - P)))
    bcomb_p = jnp.pad(b_comb, (0, Pp - P)).reshape(1, Pp)

    # ---- fused kernel: streamed x -> input proj -> recurrence -> epilogue --
    out_pad = pl.pallas_call(
        lstm_attn_kernel,
        out_shape=jax.ShapeDtypeStruct((B_tot, Pp), jnp.float32),
        grid_spec=pltpu.PrefetchScalarGridSpec(
            num_scalar_prefetch=0,
            grid=(NB, NT),                                 # (batch tiles, time chunks)
            in_specs=[
                pl.BlockSpec((TB, 1), lambda b, t: (b, 0)),               # text_len
                pl.BlockSpec((T_CHUNK, TB, Ep), lambda b, t: (t, b, 0)),  # x stream
                pl.BlockSpec((Ep, G), lambda b, t: (0, 0)),               # W_ih (bf16)
                pl.BlockSpec((1, G), lambda b, t: (0, 0)),                # b_ih+b_hh
                pl.BlockSpec((Hp, G), lambda b, t: (0, 0)),               # W_hh (bf16)
                pl.BlockSpec((Hp, Pp), lambda b, t: (0, 0)),              # folded W
                pl.BlockSpec((1, Pp), lambda b, t: (0, 0)),               # folded b
            ],
            out_specs=pl.BlockSpec((TB, Pp), lambda b, t: (b, 0)),
            scratch_shapes=[pltpu.VMEM((T_CHUNK, TB, G), jnp.float32),    # gx chunk
                            pltpu.VMEM((TB, Hp), jnp.float32),            # h state
                            pltpu.VMEM((TB, Hp), jnp.float32)],           # c state
        ),
        compiler_params=pltpu.CompilerParams(
            dimension_semantics=("parallel", "arbitrary"),
            vmem_limit_bytes=vmem_limit),
    )(lens_p, x, wih_p, bias_p, whh_p, wcomb_p, bcomb_p)

    return out_pad[:B, :P]


# ------------------------------ pure-JAX reference ---------------------------
def reference_forward(text_indices, p):
    emb = p["embedding"][text_indices]
    lens = jnp.sum(text_indices != 0, axis=-1)
    B, L, _ = emb.shape
    H = p["w_hh"].shape[1]

    def step(carry, t):
        h, c = carry
        x_t = emb[:, t, :]
        gates = x_t @ p["w_ih"].T + h @ p["w_hh"].T + p["b_ih"] + p["b_hh"]
        i = jax.nn.sigmoid(gates[:, :H])
        f = jax.nn.sigmoid(gates[:, H:2 * H])
        g = jnp.tanh(gates[:, 2 * H:3 * H])
        o = jax.nn.sigmoid(gates[:, 3 * H:])
        c_new = f * c + i * g
        h_new = o * jnp.tanh(c_new)
        m = (t < lens)[:, None].astype(jnp.float32)
        return (m * h_new + (1 - m) * h, m * c_new + (1 - m) * c), None

    (h_n, _c_n), _ = lax.scan(step,
                              (jnp.zeros((B, H), jnp.float32),
                               jnp.zeros((B, H), jnp.float32)),
                              jnp.arange(L))
    kx = h_n @ p["w_k"].T + p["b_k"]          # softmax over single key == 1
    attn = kx @ p["w_proj"].T + p["b_proj"]
    return attn @ p["w_fc"].T + p["b_fc"]


if __name__ == "__main__":
    VOCAB, EMBED_DIM, HIDDEN_DIM, POLARITIES, B, L = 50, 32, 32, 3, 2, 8

    key = jax.random.PRNGKey(0)
    k_idx, k_params = jax.random.split(key)

    # deterministic token ids, 0 = padding (trailing), lengths = [8, 5]
    ti = jax.random.randint(k_idx, (B, L), 1, VOCAB)
    lengths = jnp.array([L, 5])
    pos = jnp.arange(L)[None, :]
    text_indices = jnp.where(pos < lengths[:, None], ti, 0).astype(jnp.int32)

    params = make_params(k_params, VOCAB, EMBED_DIM, HIDDEN_DIM, POLARITIES)

    out = jax.block_until_ready(lstm_attn_forward(text_indices, params))
    ref = jax.block_until_ready(reference_forward(text_indices, params))

    assert out.shape == (B, POLARITIES)
    # Kernel runs the recurrence with bf16 matmul operands (f32 accumulation)
    # and a pre-folded f32 epilogue, so compare with a bf16-appropriate bound.
    assert jnp.max(jnp.abs(out - ref)) < 1e-2, "kernel/reference mismatch"

    print("KERNEL_OK")
</pallas_src>

<mosaic_0001>
module attributes {stable_mosaic.version = 11 : i64} {
  func.func @lstm_attn_kernel(%arg0: i32, %arg1: i32, %arg2: memref<8x1xi32, #tpu.memory_space<vmem>>, %arg3: memref<8x8x128xbf16, #tpu.memory_space<vmem>>, %arg4: memref<128x512xbf16, #tpu.memory_space<vmem>>, %arg5: memref<1x512xf32, #tpu.memory_space<vmem>>, %arg6: memref<128x512xbf16, #tpu.memory_space<vmem>>, %arg7: memref<128x128xf32, #tpu.memory_space<vmem>>, %arg8: memref<1x128xf32, #tpu.memory_space<vmem>>, %arg9: memref<8x128xf32, #tpu.memory_space<vmem>>, %arg10: memref<8x8x512xf32, #tpu.memory_space<vmem>>, %arg11: memref<8x128xf32, #tpu.memory_space<vmem>>, %arg12: memref<8x128xf32, #tpu.memory_space<vmem>>) attributes {dimension_semantics = [#tpu.dimension_semantics<parallel>, #tpu.dimension_semantics<arbitrary>], iteration_bounds = array<i64: 1, 1>, scalar_prefetch = 0 : i64, scratch_operands = 3 : i64, tpu.core_type = #tpu.core_type<tc>, window_params = [{transform_indices = @transform_0, window_bounds = array<i64: 8, 1>}, {transform_indices = @transform_1, window_bounds = array<i64: 8, 8, 128>}, {pipeline_mode = #tpu.pipeline_mode<synchronous>, transform_indices = @transform_2, window_bounds = array<i64: 128, 512>}, {pipeline_mode = #tpu.pipeline_mode<synchronous>, transform_indices = @transform_3, window_bounds = array<i64: 1, 512>}, {pipeline_mode = #tpu.pipeline_mode<synchronous>, transform_indices = @transform_4, window_bounds = array<i64: 128, 512>}, {pipeline_mode = #tpu.pipeline_mode<synchronous>, transform_indices = @transform_5, window_bounds = array<i64: 128, 128>}, {pipeline_mode = #tpu.pipeline_mode<synchronous>, transform_indices = @transform_6, window_bounds = array<i64: 1, 128>}, {transform_indices = @transform_7, window_bounds = array<i64: 8, 128>}]} {
    %c0_i32 = arith.constant 0 : i32
    %0 = arith.cmpi eq, %arg1, %c0_i32 : i32
    %1 = arith.extui %0 : i1 to i32
    %c0_i32_0 = arith.constant 0 : i32
    %2 = arith.cmpi ne, %1, %c0_i32_0 : i32
    scf.if %2 {
      %cst_74 = arith.constant 0.000000e+00 : f32
      %312 = vector.broadcast %cst_74 : f32 to vector<8x128xf32>
      %c0_75 = arith.constant 0 : index
      %c0_76 = arith.constant 0 : index
      %313 = vector.load %arg11[%c0_75, %c0_76] : memref<8x128xf32, #tpu.memory_space<vmem>>, vector<8x128xf32>
      tpu.vector_store %arg11[%c0_75, %c0_76], %312 {strides = array<i32>} : memref<8x128xf32, #tpu.memory_space<vmem>>, vector<8x128xf32>,
      %cst_77 = arith.constant 0.000000e+00 : f32
      %314 = vector.broadcast %cst_77 : f32 to vector<8x128xf32>
      %c0_78 = arith.constant 0 : index
      %c0_79 = arith.constant 0 : index
      %315 = vector.load %arg12[%c0_78, %c0_79] : memref<8x128xf32, #tpu.memory_space<vmem>>, vector<8x128xf32>
      tpu.vector_store %arg12[%c0_78, %c0_79], %314 {strides = array<i32>} : memref<8x128xf32, #tpu.memory_space<vmem>>, vector<8x128xf32>,
    } else {
    }
    %c0 = arith.constant 0 : index
    %c0_1 = arith.constant 0 : index
    %c0_2 = arith.constant 0 : index
    %3 = vector.load %arg3[%c0, %c0_1, %c0_2] : memref<8x8x128xbf16, #tpu.memory_space<vmem>>, vector<8x8x128xbf16>
    %4 = vector.shape_cast %3 : vector<8x8x128xbf16> to vector<64x128xbf16>
    %c0_3 = arith.constant 0 : index
    %c0_4 = arith.constant 0 : index
    %5 = vector.load %arg4[%c0_3, %c0_4] : memref<128x512xbf16, #tpu.memory_space<vmem>>, vector<128x512xbf16>
    %cst = arith.constant dense<0.000000e+00> : vector<64x512xf32>
    %6 = tpu.matmul %4, %5, %cst {dimension_numbers = #tpu.dot_dimension_numbers<[1], [0], [0], [1], [0, 0, 1, 1], [], []>} : vector<64x128xbf16>, vector<128x512xbf16>, vector<64x512xf32> -> vector<64x512xf32>
    %c0_5 = arith.constant 0 : index
    %c0_6 = arith.constant 0 : index
    %7 = vector.load %arg5[%c0_5, %c0_6] : memref<1x512xf32, #tpu.memory_space<vmem>>, vector<1x512xf32>
    %8 = vector.broadcast %7 : vector<1x512xf32> to vector<64x512xf32>
    %9 = arith.addf %6, %8 : vector<64x512xf32>
    %10 = vector.shape_cast %9 : vector<64x512xf32> to vector<8x8x512xf32>
    %c0_7 = arith.constant 0 : index
    %c0_8 = arith.constant 0 : index
    %c0_9 = arith.constant 0 : index
    %11 = vector.load %arg10[%c0_7, %c0_8, %c0_9] : memref<8x8x512xf32, #tpu.memory_space<vmem>>, vector<8x8x512xf32>
    tpu.vector_store %arg10[%c0_7, %c0_8, %c0_9], %10 {strides = array<i32>} : memref<8x8x512xf32, #tpu.memory_space<vmem>>, vector<8x8x512xf32>,
    %c0_10 = arith.constant 0 : index
    %c0_11 = arith.constant 0 : index
    %12 = vector.load %arg6[%c0_10, %c0_11] : memref<128x512xbf16, #tpu.memory_space<vmem>>, vector<128x512xbf16>
    %c0_12 = arith.constant 0 : index
    %c0_13 = arith.constant 0 : index
    %13 = vector.load %arg2[%c0_12, %c0_13] : memref<8x1xi32, #tpu.memory_space<vmem>>, vector<8x1xi32>
    %14 = vector.shape_cast %13 : vector<8x1xi32> to vector<8x1xi32>
    %15 = vector.broadcast %14 : vector<8x1xi32> to vector<8x128xi32>
    %c8_i32 = arith.constant 8 : i32
    %16 = arith.muli %arg1, %c8_i32 : i32
    %c0_14 = arith.constant 0 : index
    %c0_15 = arith.constant 0 : index
    %17 = vector.load %arg11[%c0_14, %c0_15] : memref<8x128xf32, #tpu.memory_space<vmem>>, vector<8x128xf32>
    %c0_16 = arith.constant 0 : index
    %c0_17 = arith.constant 0 : index
    %18 = vector.load %arg12[%c0_16, %c0_17] : memref<8x128xf32, #tpu.memory_space<vmem>>, vector<8x128xf32>
    %c0_i32_18 = arith.constant 0 : i32
    %19 = arith.index_cast %c0_i32_18 : i32 to index
    %c0_19 = arith.constant 0 : index
    %c0_20 = arith.constant 0 : index
    %20 = vector.load %arg10[%19, %c0_19, %c0_20] : memref<8x8x512xf32, #tpu.memory_space<vmem>>, vector<1x8x512xf32>
    %21 = vector.shape_cast %20 : vector<1x8x512xf32> to vector<8x512xf32>
    %22 = arith.truncf %17 : vector<8x128xf32> to vector<8x128xbf16>
    %cst_21 = arith.constant dense<0.000000e+00> : vector<8x512xf32>
    %23 = tpu.matmul %22, %12, %cst_21 {dimension_numbers = #tpu.dot_dimension_numbers<[1], [0], [0], [1], [0, 0, 1, 1], [], []>} : vector<8x128xbf16>, vector<128x512xbf16>, vector<8x512xf32> -> vector<8x512xf32>
    %24 = arith.addf %21, %23 : vector<8x512xf32>
    %25 = vector.extract_strided_slice %24 {offsets = [0, 0], sizes = [8, 128], strides = [1, 1]} : vector<8x512xf32> to vector<8x128xf32>
    %26 = arith.negf %25 : vector<8x128xf32>
    %27 = math.exp %26 : vector<8x128xf32>
    %cst_22 = arith.constant 1.000000e+00 : f32
    %28 = vector.broadcast %cst_22 : f32 to vector<8x128xf32>
    %29 = arith.addf %28, %27 : vector<8x128xf32>
    %30 = arith.divf %28, %29 : vector<8x128xf32>
    %31 = vector.extract_strided_slice %24 {offsets = [0, 128], sizes = [8, 128], strides = [1, 1]} : vector<8x512xf32> to vector<8x128xf32>
    %32 = arith.negf %31 : vector<8x128xf32>
    %33 = math.exp %32 : vector<8x128xf32>
    %cst_23 = arith.constant 1.000000e+00 : f32
    %34 = vector.broadcast %cst_23 : f32 to vector<8x128xf32>
    %35 = arith.addf %34, %33 : vector<8x128xf32>
    %36 = arith.divf %34, %35 : vector<8x128xf32>
    %37 = vector.extract_strided_slice %24 {offsets = [0, 256], sizes = [8, 128], strides = [1, 1]} : vector<8x512xf32> to vector<8x128xf32>
    %38 = math.tanh %37 : vector<8x128xf32>
    %39 = vector.extract_strided_slice %24 {offsets = [0, 384], sizes = [8, 128], strides = [1, 1]} : vector<8x512xf32> to vector<8x128xf32>
    %40 = arith.negf %39 : vector<8x128xf32>
    %41 = math.exp %40 : vector<8x128xf32>
    %cst_24 = arith.constant 1.000000e+00 : f32
    %42 = vector.broadcast %cst_24 : f32 to vector<8x128xf32>
    %43 = arith.addf %42, %41 : vector<8x128xf32>
    %44 = arith.divf %42, %43 : vector<8x128xf32>
    %45 = arith.mulf %36, %18 : vector<8x128xf32>
    %46 = arith.mulf %30, %38 : vector<8x128xf32>
    %47 = arith.addf %45, %46 : vector<8x128xf32>
    %48 = math.tanh %47 : vector<8x128xf32>
    %49 = arith.mulf %44, %48 : vector<8x128xf32>
    %50 = arith.addi %16, %c0_i32_18 : i32
    %51 = vector.broadcast %50 : i32 to vector<8x128xi32>
    %52 = arith.cmpi slt, %51, %15 : vector<8x128xi32>
    %53 = arith.select %52, %49, %17 : vector<8x128xi1>, vector<8x128xf32>
    %54 = arith.select %52, %47, %18 : vector<8x128xi1>, vector<8x128xf32>
    %c1_i32 = arith.constant 1 : i32
    %55 = arith.index_cast %c1_i32 : i32 to index
    %c0_25 = arith.constant 0 : index
    %c0_26 = arith.constant 0 : index
    %56 = vector.load %arg10[%55, %c0_25, %c0_26] : memref<8x8x512xf32, #tpu.memory_space<vmem>>, vector<1x8x512xf32>
    %57 = vector.shape_cast %56 : vector<1x8x512xf32> to vector<8x512xf32>
    %58 = arith.truncf %53 : vector<8x128xf32> to vector<8x128xbf16>
    %cst_27 = arith.constant dense<0.000000e+00> : vector<8x512xf32>
    %59 = tpu.matmul %58, %12, %cst_27 {dimension_numbers = #tpu.dot_dimension_numbers<[1], [0], [0], [1], [0, 0, 1, 1], [], []>} : vector<8x128xbf16>, vector<128x512xbf16>, vector<8x512xf32> -> vector<8x512xf32>
    %60 = arith.addf %57, %59 : vector<8x512xf32>
    %61 = vector.extract_strided_slice %60 {offsets = [0, 0], sizes = [8, 128], strides = [1, 1]} : vector<8x512xf32> to vector<8x128xf32>
    %62 = arith.negf %61 : vector<8x128xf32>
    %63 = math.exp %62 : vector<8x128xf32>
    %cst_28 = arith.constant 1.000000e+00 : f32
    %64 = vector.broadcast %cst_28 : f32 to vector<8x128xf32>
    %65 = arith.addf %64, %63 : vector<8x128xf32>
    %66 = arith.divf %64, %65 : vector<8x128xf32>
    %67 = vector.extract_strided_slice %60 {offsets = [0, 128], sizes = [8, 128], strides = [1, 1]} : vector<8x512xf32> to vector<8x128xf32>
    %68 = arith.negf %67 : vector<8x128xf32>
    %69 = math.exp %68 : vector<8x128xf32>
    %cst_29 = arith.constant 1.000000e+00 : f32
    %70 = vector.broadcast %cst_29 : f32 to vector<8x128xf32>
    %71 = arith.addf %70, %69 : vector<8x128xf32>
    %72 = arith.divf %70, %71 : vector<8x128xf32>
    %73 = vector.extract_strided_slice %60 {offsets = [0, 256], sizes = [8, 128], strides = [1, 1]} : vector<8x512xf32> to vector<8x128xf32>
    %74 = math.tanh %73 : vector<8x128xf32>
    %75 = vector.extract_strided_slice %60 {offsets = [0, 384], sizes = [8, 128], strides = [1, 1]} : vector<8x512xf32> to vector<8x128xf32>
    %76 = arith.negf %75 : vector<8x128xf32>
    %77 = math.exp %76 : vector<8x128xf32>
    %cst_30 = arith.constant 1.000000e+00 : f32
    %78 = vector.broadcast %cst_30 : f32 to vector<8x128xf32>
    %79 = arith.addf %78, %77 : vector<8x128xf32>
    %80 = arith.divf %78, %79 : vector<8x128xf32>
    %81 = arith.mulf %72, %54 : vector<8x128xf32>
    %82 = arith.mulf %66, %74 : vector<8x128xf32>
    %83 = arith.addf %81, %82 : vector<8x128xf32>
    %84 = math.tanh %83 : vector<8x128xf32>
    %85 = arith.mulf %80, %84 : vector<8x128xf32>
    %86 = arith.addi %16, %c1_i32 : i32
    %87 = vector.broadcast %86 : i32 to vector<8x128xi32>
    %88 = arith.cmpi slt, %87, %15 : vector<8x128xi32>
    %89 = arith.select %88, %85, %53 : vector<8x128xi1>, vector<8x128xf32>
    %90 = arith.select %88, %83, %54 : vector<8x128xi1>, vector<8x128xf32>
    %c2_i32 = arith.constant 2 : i32
    %91 = arith.index_cast %c2_i32 : i32 to index
    %c0_31 = arith.constant 0 : index
    %c0_32 = arith.constant 0 : index
    %92 = vector.load %arg10[%91, %c0_31, %c0_32] : memref<8x8x512xf32, #tpu.memory_space<vmem>>, vector<1x8x512xf32>
    %93 = vector.shape_cast %92 : vector<1x8x512xf32> to vector<8x512xf32>
    %94 = arith.truncf %89 : vector<8x128xf32> to vector<8x128xbf16>
    %cst_33 = arith.constant dense<0.000000e+00> : vector<8x512xf32>
    %95 = tpu.matmul %94, %12, %cst_33 {dimension_numbers = #tpu.dot_dimension_numbers<[1], [0], [0], [1], [0, 0, 1, 1], [], []>} : vector<8x128xbf16>, vector<128x512xbf16>, vector<8x512xf32> -> vector<8x512xf32>
    %96 = arith.addf %93, %95 : vector<8x512xf32>
    %97 = vector.extract_strided_slice %96 {offsets = [0, 0], sizes = [8, 128], strides = [1, 1]} : vector<8x512xf32> to vector<8x128xf32>
    %98 = arith.negf %97 : vector<8x128xf32>
    %99 = math.exp %98 : vector<8x128xf32>
    %cst_34 = arith.constant 1.000000e+00 : f32
    %100 = vector.broadcast %cst_34 : f32 to vector<8x128xf32>
    %101 = arith.addf %100, %99 : vector<8x128xf32>
    %102 = arith.divf %100, %101 : vector<8x128xf32>
    %103 = vector.extract_strided_slice %96 {offsets = [0, 128], sizes = [8, 128], strides = [1, 1]} : vector<8x512xf32> to vector<8x128xf32>
    %104 = arith.negf %103 : vector<8x128xf32>
    %105 = math.exp %104 : vector<8x128xf32>
    %cst_35 = arith.constant 1.000000e+00 : f32
    %106 = vector.broadcast %cst_35 : f32 to vector<8x128xf32>
    %107 = arith.addf %106, %105 : vector<8x128xf32>
    %108 = arith.divf %106, %107 : vector<8x128xf32>
    %109 = vector.extract_strided_slice %96 {offsets = [0, 256], sizes = [8, 128], strides = [1, 1]} : vector<8x512xf32> to vector<8x128xf32>
    %110 = math.tanh %109 : vector<8x128xf32>
    %111 = vector.extract_strided_slice %96 {offsets = [0, 384], sizes = [8, 128], strides = [1, 1]} : vector<8x512xf32> to vector<8x128xf32>
    %112 = arith.negf %111 : vector<8x128xf32>
    %113 = math.exp %112 : vector<8x128xf32>
    %cst_36 = arith.constant 1.000000e+00 : f32
    %114 = vector.broadcast %cst_36 : f32 to vector<8x128xf32>
    %115 = arith.addf %114, %113 : vector<8x128xf32>
    %116 = arith.divf %114, %115 : vector<8x128xf32>
    %117 = arith.mulf %108, %90 : vector<8x128xf32>
    %118 = arith.mulf %102, %110 : vector<8x128xf32>
    %119 = arith.addf %117, %118 : vector<8x128xf32>
    %120 = math.tanh %119 : vector<8x128xf32>
    %121 = arith.mulf %116, %120 : vector<8x128xf32>
    %122 = arith.addi %16, %c2_i32 : i32
    %123 = vector.broadcast %122 : i32 to vector<8x128xi32>
    %124 = arith.cmpi slt, %123, %15 : vector<8x128xi32>
    %125 = arith.select %124, %121, %89 : vector<8x128xi1>, vector<8x128xf32>
    %126 = arith.select %124, %119, %90 : vector<8x128xi1>, vector<8x128xf32>
    %c3_i32 = arith.constant 3 : i32
    %127 = arith.index_cast %c3_i32 : i32 to index
    %c0_37 = arith.constant 0 : index
    %c0_38 = arith.constant 0 : index
    %128 = vector.load %arg10[%127, %c0_37, %c0_38] : memref<8x8x512xf32, #tpu.memory_space<vmem>>, vector<1x8x512xf32>
    %129 = vector.shape_cast %128 : vector<1x8x512xf32> to vector<8x512xf32>
    %130 = arith.truncf %125 : vector<8x128xf32> to vector<8x128xbf16>
    %cst_39 = arith.constant dense<0.000000e+00> : vector<8x512xf32>
    %131 = tpu.matmul %130, %12, %cst_39 {dimension_numbers = #tpu.dot_dimension_numbers<[1], [0], [0], [1], [0, 0, 1, 1], [], []>} : vector<8x128xbf16>, vector<128x512xbf16>, vector<8x512xf32> -> vector<8x512xf32>
    %132 = arith.addf %129, %131 : vector<8x512xf32>
    %133 = vector.extract_strided_slice %132 {offsets = [0, 0], sizes = [8, 128], strides = [1, 1]} : vector<8x512xf32> to vector<8x128xf32>
    %134 = arith.negf %133 : vector<8x128xf32>
    %135 = math.exp %134 : vector<8x128xf32>
    %cst_40 = arith.constant 1.000000e+00 : f32
    %136 = vector.broadcast %cst_40 : f32 to vector<8x128xf32>
    %137 = arith.addf %136, %135 : vector<8x128xf32>
    %138 = arith.divf %136, %137 : vector<8x128xf32>
    %139 = vector.extract_strided_slice %132 {offsets = [0, 128], sizes = [8, 128], strides = [1, 1]} : vector<8x512xf32> to vector<8x128xf32>
    %140 = arith.negf %139 : vector<8x128xf32>
    %141 = math.exp %140 : vector<8x128xf32>
    %cst_41 = arith.constant 1.000000e+00 : f32
    %142 = vector.broadcast %cst_41 : f32 to vector<8x128xf32>
    %143 = arith.addf %142, %141 : vector<8x128xf32>
    %144 = arith.divf %142, %143 : vector<8x128xf32>
    %145 = vector.extract_strided_slice %132 {offsets = [0, 256], sizes = [8, 128], strides = [1, 1]} : vector<8x512xf32> to vector<8x128xf32>
    %146 = math.tanh %145 : vector<8x128xf32>
    %147 = vector.extract_strided_slice %132 {offsets = [0, 384], sizes = [8, 128], strides = [1, 1]} : vector<8x512xf32> to vector<8x128xf32>
    %148 = arith.negf %147 : vector<8x128xf32>
    %149 = math.exp %148 : vector<8x128xf32>
    %cst_42 = arith.constant 1.000000e+00 : f32
    %150 = vector.broadcast %cst_42 : f32 to vector<8x128xf32>
    %151 = arith.addf %150, %149 : vector<8x128xf32>
    %152 = arith.divf %150, %151 : vector<8x128xf32>
    %153 = arith.mulf %144, %126 : vector<8x128xf32>
    %154 = arith.mulf %138, %146 : vector<8x128xf32>
    %155 = arith.addf %153, %154 : vector<8x128xf32>
    %156 = math.tanh %155 : vector<8x128xf32>
    %157 = arith.mulf %152, %156 : vector<8x128xf32>
    %158 = arith.addi %16, %c3_i32 : i32
    %159 = vector.broadcast %158 : i32 to vector<8x128xi32>
    %160 = arith.cmpi slt, %159, %15 : vector<8x128xi32>
    %161 = arith.select %160, %157, %125 : vector<8x128xi1>, vector<8x128xf32>
    %162 = arith.select %160, %155, %126 : vector<8x128xi1>, vector<8x128xf32>
    %c4_i32 = arith.constant 4 : i32
    %163 = arith.index_cast %c4_i32 : i32 to index
    %c0_43 = arith.constant 0 : index
    %c0_44 = arith.constant 0 : index
    %164 = vector.load %arg10[%163, %c0_43, %c0_44] : memref<8x8x512xf32, #tpu.memory_space<vmem>>, vector<1x8x512xf32>
    %165 = vector.shape_cast %164 : vector<1x8x512xf32> to vector<8x512xf32>
    %166 = arith.truncf %161 : vector<8x128xf32> to vector<8x128xbf16>
    %cst_45 = arith.constant dense<0.000000e+00> : vector<8x512xf32>
    %167 = tpu.matmul %166, %12, %cst_45 {dimension_numbers = #tpu.dot_dimension_numbers<[1], [0], [0], [1], [0, 0, 1, 1], [], []>} : vector<8x128xbf16>, vector<128x512xbf16>, vector<8x512xf32> -> vector<8x512xf32>
    %168 = arith.addf %165, %167 : vector<8x512xf32>
    %169 = vector.extract_strided_slice %168 {offsets = [0, 0], sizes = [8, 128], strides = [1, 1]} : vector<8x512xf32> to vector<8x128xf32>
    %170 = arith.negf %169 : vector<8x128xf32>
    %171 = math.exp %170 : vector<8x128xf32>
    %cst_46 = arith.constant 1.000000e+00 : f32
    %172 = vector.broadcast %cst_46 : f32 to vector<8x128xf32>
    %173 = arith.addf %172, %171 : vector<8x128xf32>
    %174 = arith.divf %172, %173 : vector<8x128xf32>
    %175 = vector.extract_strided_slice %168 {offsets = [0, 128], sizes = [8, 128], strides = [1, 1]} : vector<8x512xf32> to vector<8x128xf32>
    %176 = arith.negf %175 : vector<8x128xf32>
    %177 = math.exp %176 : vector<8x128xf32>
    %cst_47 = arith.constant 1.000000e+00 : f32
    %178 = vector.broadcast %cst_47 : f32 to vector<8x128xf32>
    %179 = arith.addf %178, %177 : vector<8x128xf32>
    %180 = arith.divf %178, %179 : vector<8x128xf32>
    %181 = vector.extract_strided_slice %168 {offsets = [0, 256], sizes = [8, 128], strides = [1, 1]} : vector<8x512xf32> to vector<8x128xf32>
    %182 = math.tanh %181 : vector<8x128xf32>
    %183 = vector.extract_strided_slice %168 {offsets = [0, 384], sizes = [8, 128], strides = [1, 1]} : vector<8x512xf32> to vector<8x128xf32>
    %184 = arith.negf %183 : vector<8x128xf32>
    %185 = math.exp %184 : vector<8x128xf32>
    %cst_48 = arith.constant 1.000000e+00 : f32
    %186 = vector.broadcast %cst_48 : f32 to vector<8x128xf32>
    %187 = arith.addf %186, %185 : vector<8x128xf32>
    %188 = arith.divf %186, %187 : vector<8x128xf32>
    %189 = arith.mulf %180, %162 : vector<8x128xf32>
    %190 = arith.mulf %174, %182 : vector<8x128xf32>
    %191 = arith.addf %189, %190 : vector<8x128xf32>
    %192 = math.tanh %191 : vector<8x128xf32>
    %193 = arith.mulf %188, %192 : vector<8x128xf32>
    %194 = arith.addi %16, %c4_i32 : i32
    %195 = vector.broadcast %194 : i32 to vector<8x128xi32>
    %196 = arith.cmpi slt, %195, %15 : vector<8x128xi32>
    %197 = arith.select %196, %193, %161 : vector<8x128xi1>, vector<8x128xf32>
    %198 = arith.select %196, %191, %162 : vector<8x128xi1>, vector<8x128xf32>
    %c5_i32 = arith.constant 5 : i32
    %199 = arith.index_cast %c5_i32 : i32 to index
    %c0_49 = arith.constant 0 : index
    %c0_50 = arith.constant 0 : index
    %200 = vector.load %arg10[%199, %c0_49, %c0_50] : memref<8x8x512xf32, #tpu.memory_space<vmem>>, vector<1x8x512xf32>
    %201 = vector.shape_cast %200 : vector<1x8x512xf32> to vector<8x512xf32>
    %202 = arith.truncf %197 : vector<8x128xf32> to vector<8x128xbf16>
    %cst_51 = arith.constant dense<0.000000e+00> : vector<8x512xf32>
    %203 = tpu.matmul %202, %12, %cst_51 {dimension_numbers = #tpu.dot_dimension_numbers<[1], [0], [0], [1], [0, 0, 1, 1], [], []>} : vector<8x128xbf16>, vector<128x512xbf16>, vector<8x512xf32> -> vector<8x512xf32>
    %204 = arith.addf %201, %203 : vector<8x512xf32>
    %205 = vector.extract_strided_slice %204 {offsets = [0, 0], sizes = [8, 128], strides = [1, 1]} : vector<8x512xf32> to vector<8x128xf32>
    %206 = arith.negf %205 : vector<8x128xf32>
    %207 = math.exp %206 : vector<8x128xf32>
    %cst_52 = arith.constant 1.000000e+00 : f32
    %208 = vector.broadcast %cst_52 : f32 to vector<8x128xf32>
    %209 = arith.addf %208, %207 : vector<8x128xf32>
    %210 = arith.divf %208, %209 : vector<8x128xf32>
    %211 = vector.extract_strided_slice %204 {offsets = [0, 128], sizes = [8, 128], strides = [1, 1]} : vector<8x512xf32> to vector<8x128xf32>
    %212 = arith.negf %211 : vector<8x128xf32>
    %213 = math.exp %212 : vector<8x128xf32>
    %cst_53 = arith.constant 1.000000e+00 : f32
    %214 = vector.broadcast %cst_53 : f32 to vector<8x128xf32>
    %215 = arith.addf %214, %213 : vector<8x128xf32>
    %216 = arith.divf %214, %215 : vector<8x128xf32>
    %217 = vector.extract_strided_slice %204 {offsets = [0, 256], sizes = [8, 128], strides = [1, 1]} : vector<8x512xf32> to vector<8x128xf32>
    %218 = math.tanh %217 : vector<8x128xf32>
    %219 = vector.extract_strided_slice %204 {offsets = [0, 384], sizes = [8, 128], strides = [1, 1]} : vector<8x512xf32> to vector<8x128xf32>
    %220 = arith.negf %219 : vector<8x128xf32>
    %221 = math.exp %220 : vector<8x128xf32>
    %cst_54 = arith.constant 1.000000e+00 : f32
    %222 = vector.broadcast %cst_54 : f32 to vector<8x128xf32>
    %223 = arith.addf %222, %221 : vector<8x128xf32>
    %224 = arith.divf %222, %223 : vector<8x128xf32>
    %225 = arith.mulf %216, %198 : vector<8x128xf32>
    %226 = arith.mulf %210, %218 : vector<8x128xf32>
    %227 = arith.addf %225, %226 : vector<8x128xf32>
    %228 = math.tanh %227 : vector<8x128xf32>
    %229 = arith.mulf %224, %228 : vector<8x128xf32>
    %230 = arith.addi %16, %c5_i32 : i32
    %231 = vector.broadcast %230 : i32 to vector<8x128xi32>
    %232 = arith.cmpi slt, %231, %15 : vector<8x128xi32>
    %233 = arith.select %232, %229, %197 : vector<8x128xi1>, vector<8x128xf32>
    %234 = arith.select %232, %227, %198 : vector<8x128xi1>, vector<8x128xf32>
    %c6_i32 = arith.constant 6 : i32
    %235 = arith.index_cast %c6_i32 : i32 to index
    %c0_55 = arith.constant 0 : index
    %c0_56 = arith.constant 0 : index
    %236 = vector.load %arg10[%235, %c0_55, %c0_56] : memref<8x8x512xf32, #tpu.memory_space<vmem>>, vector<1x8x512xf32>
    %237 = vector.shape_cast %236 : vector<1x8x512xf32> to vector<8x512xf32>
    %238 = arith.truncf %233 : vector<8x128xf32> to vector<8x128xbf16>
    %cst_57 = arith.constant dense<0.000000e+00> : vector<8x512xf32>
    %239 = tpu.matmul %238, %12, %cst_57 {dimension_numbers = #tpu.dot_dimension_numbers<[1], [0], [0], [1], [0, 0, 1, 1], [], []>} : vector<8x128xbf16>, vector<128x512xbf16>, vector<8x512xf32> -> vector<8x512xf32>
    %240 = arith.addf %237, %239 : vector<8x512xf32>
    %241 = vector.extract_strided_slice %240 {offsets = [0, 0], sizes = [8, 128], strides = [1, 1]} : vector<8x512xf32> to vector<8x128xf32>
    %242 = arith.negf %241 : vector<8x128xf32>
    %243 = math.exp %242 : vector<8x128xf32>
    %cst_58 = arith.constant 1.000000e+00 : f32
    %244 = vector.broadcast %cst_58 : f32 to vector<8x128xf32>
    %245 = arith.addf %244, %243 : vector<8x128xf32>
    %246 = arith.divf %244, %245 : vector<8x128xf32>
    %247 = vector.extract_strided_slice %240 {offsets = [0, 128], sizes = [8, 128], strides = [1, 1]} : vector<8x512xf32> to vector<8x128xf32>
    %248 = arith.negf %247 : vector<8x128xf32>
    %249 = math.exp %248 : vector<8x128xf32>
    %cst_59 = arith.constant 1.000000e+00 : f32
    %250 = vector.broadcast %cst_59 : f32 to vector<8x128xf32>
    %251 = arith.addf %250, %249 : vector<8x128xf32>
    %252 = arith.divf %250, %251 : vector<8x128xf32>
    %253 = vector.extract_strided_slice %240 {offsets = [0, 256], sizes = [8, 128], strides = [1, 1]} : vector<8x512xf32> to vector<8x128xf32>
    %254 = math.tanh %253 : vector<8x128xf32>
    %255 = vector.extract_strided_slice %240 {offsets = [0, 384], sizes = [8, 128], strides = [1, 1]} : vector<8x512xf32> to vector<8x128xf32>
    %256 = arith.negf %255 : vector<8x128xf32>
    %257 = math.exp %256 : vector<8x128xf32>
    %cst_60 = arith.constant 1.000000e+00 : f32
    %258 = vector.broadcast %cst_60 : f32 to vector<8x128xf32>
    %259 = arith.addf %258, %257 : vector<8x128xf32>
    %260 = arith.divf %258, %259 : vector<8x128xf32>
    %261 = arith.mulf %252, %234 : vector<8x128xf32>
    %262 = arith.mulf %246, %254 : vector<8x128xf32>
    %263 = arith.addf %261, %262 : vector<8x128xf32>
    %264 = math.tanh %263 : vector<8x128xf32>
    %265 = arith.mulf %260, %264 : vector<8x128xf32>
    %266 = arith.addi %16, %c6_i32 : i32
    %267 = vector.broadcast %266 : i32 to vector<8x128xi32>
    %268 = arith.cmpi slt, %267, %15 : vector<8x128xi32>
    %269 = arith.select %268, %265, %233 : vector<8x128xi1>, vector<8x128xf32>
    %270 = arith.select %268, %263, %234 : vector<8x128xi1>, vector<8x128xf32>
    %c7_i32 = arith.constant 7 : i32
    %271 = arith.index_cast %c7_i32 : i32 to index
    %c0_61 = arith.constant 0 : index
    %c0_62 = arith.constant 0 : index
    %272 = vector.load %arg10[%271, %c0_61, %c0_62] : memref<8x8x512xf32, #tpu.memory_space<vmem>>, vector<1x8x512xf32>
    %273 = vector.shape_cast %272 : vector<1x8x512xf32> to vector<8x512xf32>
    %274 = arith.truncf %269 : vector<8x128xf32> to vector<8x128xbf16>
    %cst_63 = arith.constant dense<0.000000e+00> : vector<8x512xf32>
    %275 = tpu.matmul %274, %12, %cst_63 {dimension_numbers = #tpu.dot_dimension_numbers<[1], [0], [0], [1], [0, 0, 1, 1], [], []>} : vector<8x128xbf16>, vector<128x512xbf16>, vector<8x512xf32> -> vector<8x512xf32>
    %276 = arith.addf %273, %275 : vector<8x512xf32>
    %277 = vector.extract_strided_slice %276 {offsets = [0, 0], sizes = [8, 128], strides = [1, 1]} : vector<8x512xf32> to vector<8x128xf32>
    %278 = arith.negf %277 : vector<8x128xf32>
    %279 = math.exp %278 : vector<8x128xf32>
    %cst_64 = arith.constant 1.000000e+00 : f32
    %280 = vector.broadcast %cst_64 : f32 to vector<8x128xf32>
    %281 = arith.addf %280, %279 : vector<8x128xf32>
    %282 = arith.divf %280, %281 : vector<8x128xf32>
    %283 = vector.extract_strided_slice %276 {offsets = [0, 128], sizes = [8, 128], strides = [1, 1]} : vector<8x512xf32> to vector<8x128xf32>
    %284 = arith.negf %283 : vector<8x128xf32>
    %285 = math.exp %284 : vector<8x128xf32>
    %cst_65 = arith.constant 1.000000e+00 : f32
    %286 = vector.broadcast %cst_65 : f32 to vector<8x128xf32>
    %287 = arith.addf %286, %285 : vector<8x128xf32>
    %288 = arith.divf %286, %287 : vector<8x128xf32>
    %289 = vector.extract_strided_slice %276 {offsets = [0, 256], sizes = [8, 128], strides = [1, 1]} : vector<8x512xf32> to vector<8x128xf32>
    %290 = math.tanh %289 : vector<8x128xf32>
    %291 = vector.extract_strided_slice %276 {offsets = [0, 384], sizes = [8, 128], strides = [1, 1]} : vector<8x512xf32> to vector<8x128xf32>
    %292 = arith.negf %291 : vector<8x128xf32>
    %293 = math.exp %292 : vector<8x128xf32>
    %cst_66 = arith.constant 1.000000e+00 : f32
    %294 = vector.broadcast %cst_66 : f32 to vector<8x128xf32>
    %295 = arith.addf %294, %293 : vector<8x128xf32>
    %296 = arith.divf %294, %295 : vector<8x128xf32>
    %297 = arith.mulf %288, %270 : vector<8x128xf32>
    %298 = arith.mulf %282, %290 : vector<8x128xf32>
    %299 = arith.addf %297, %298 : vector<8x128xf32>
    %300 = math.tanh %299 : vector<8x128xf32>
    %301 = arith.mulf %296, %300 : vector<8x128xf32>
    %302 = arith.addi %16, %c7_i32 : i32
    %303 = vector.broadcast %302 : i32 to vector<8x128xi32>
    %304 = arith.cmpi slt, %303, %15 : vector<8x128xi32>
    %305 = arith.select %304, %301, %269 : vector<8x128xi1>, vector<8x128xf32>
    %306 = arith.select %304, %299, %270 : vector<8x128xi1>, vector<8x128xf32>
    %c8_i32_67 = arith.constant 8 : i32
    %c0_68 = arith.constant 0 : index
    %c0_69 = arith.constant 0 : index
    %307 = vector.load %arg11[%c0_68, %c0_69] : memref<8x128xf32, #tpu.memory_space<vmem>>, vector<8x128xf32>
    tpu.vector_store %arg11[%c0_68, %c0_69], %305 {strides = array<i32>} : memref<8x128xf32, #tpu.memory_space<vmem>>, vector<8x128xf32>,
    %c0_70 = arith.constant 0 : index
    %c0_71 = arith.constant 0 : index
    %308 = vector.load %arg12[%c0_70, %c0_71] : memref<8x128xf32, #tpu.memory_space<vmem>>, vector<8x128xf32>
    tpu.vector_store %arg12[%c0_70, %c0_71], %306 {strides = array<i32>} : memref<8x128xf32, #tpu.memory_space<vmem>>, vector<8x128xf32>,
    %c0_i32_72 = arith.constant 0 : i32
    %309 = arith.cmpi eq, %arg1, %c0_i32_72 : i32
    %310 = arith.extui %309 : i1 to i32
    %c0_i32_73 = arith.constant 0 : i32
    %311 = arith.cmpi ne, %310, %c0_i32_73 : i32
    scf.if %311 {
      %c0_74 = arith.constant 0 : index
      %c0_75 = arith.constant 0 : index
      %312 = vector.load %arg11[%c0_74, %c0_75] : memref<8x128xf32, #tpu.memory_space<vmem>>, vector<8x128xf32>
      %c0_76 = arith.constant 0 : index
      %c0_77 = arith.constant 0 : index
      %313 = vector.load %arg7[%c0_76, %c0_77] : memref<128x128xf32, #tpu.memory_space<vmem>>, vector<128x128xf32>
      %cst_78 = arith.constant dense<0.000000e+00> : vector<8x128xf32>
      %314 = tpu.matmul %312, %313, %cst_78 {dimension_numbers = #tpu.dot_dimension_numbers<[1], [0], [0], [1], [0, 0, 1, 1], [], []>} : vector<8x128xf32>, vector<128x128xf32>, vector<8x128xf32> -> vector<8x128xf32>
      %c0_79 = arith.constant 0 : index
      %c0_80 = arith.constant 0 : index
      %315 = vector.load %arg8[%c0_79, %c0_80] : memref<1x128xf32, #tpu.memory_space<vmem>>, vector<1x128xf32>
      %316 = vector.broadcast %315 : vector<1x128xf32> to vector<8x128xf32>
      %317 = arith.addf %314, %316 : vector<8x128xf32>
      %c0_81 = arith.constant 0 : index
      %c0_82 = arith.constant 0 : index
      %318 = vector.load %arg9[%c0_81, %c0_82] : memref<8x128xf32, #tpu.memory_space<vmem>>, vector<8x128xf32>
      tpu.vector_store %arg9[%c0_81, %c0_82], %317 {strides = array<i32>} : memref<8x128xf32, #tpu.memory_space<vmem>>, vector<8x128xf32>,
    } else {
    }
    return
  }
  func.func @transform_0(%arg0: i32, %arg1: i32) -> (i32, i32) {
    %c0_i32 = arith.constant 0 : i32
    %c0_i32_0 = arith.constant 0 : i32
    return %arg0, %c0_i32 : i32, i32
  }
  func.func @transform_1(%arg0: i32, %arg1: i32) -> (i32, i32, i32) {
    %c0_i32 = arith.constant 0 : i32
    %c0_i32_0 = arith.constant 0 : i32
    return %arg1, %arg0, %c0_i32 : i32, i32, i32
  }
  func.func @transform_2(%arg0: i32, %arg1: i32) -> (i32, i32) {
    %c0_i32 = arith.constant 0 : i32
    %c0_i32_0 = arith.constant 0 : i32
    %c0_i32_1 = arith.constant 0 : i32
    return %c0_i32, %c0_i32_0 : i32, i32
  }
  func.func @transform_3(%arg0: i32, %arg1: i32) -> (i32, i32) {
    %c0_i32 = arith.constant 0 : i32
    %c0_i32_0 = arith.constant 0 : i32
    %c0_i32_1 = arith.constant 0 : i32
    return %c0_i32, %c0_i32_0 : i32, i32
  }
  func.func @transform_4(%arg0: i32, %arg1: i32) -> (i32, i32) {
    %c0_i32 = arith.constant 0 : i32
    %c0_i32_0 = arith.constant 0 : i32
    %c0_i32_1 = arith.constant 0 : i32
    return %c0_i32, %c0_i32_0 : i32, i32
  }
  func.func @transform_5(%arg0: i32, %arg1: i32) -> (i32, i32) {
    %c0_i32 = arith.constant 0 : i32
    %c0_i32_0 = arith.constant 0 : i32
    %c0_i32_1 = arith.constant 0 : i32
    return %c0_i32, %c0_i32_0 : i32, i32
  }
  func.func @transform_6(%arg0: i32, %arg1: i32) -> (i32, i32) {
    %c0_i32 = arith.constant 0 : i32
    %c0_i32_0 = arith.constant 0 : i32
    %c0_i32_1 = arith.constant 0 : i32
    return %c0_i32, %c0_i32_0 : i32, i32
  }
  func.func @transform_7(%arg0: i32, %arg1: i32) -> (i32, i32) {
    %c0_i32 = arith.constant 0 : i32
    %c0_i32_0 = arith.constant 0 : i32
    return %arg0, %c0_i32 : i32, i32
  }
}

</mosaic_0001>

<llo_original>
// kernel: tpu_custom_call.1
$region0: #{tpu_custom_call.1}
  #allocation0 [shape = 'u32[]', space=smem, size = 0x4, offset = 0x4, fixed_abs, tag = 'smem constant byte address 0x4 - core index']
  #allocation1 [shape = 'u32[144,128]{1,0:T(1,128)}', space=vmem, size = 0x12000, scoped, tag = 'internal scratch']
  #allocation2 [shape = 'f32[8,8,512]{2,1,0:T(8,128)}', space=vmem, size = 0x20000, scoped, tag = 'scratch operand']
  #allocation3 [shape = 'f32[8,128]{1,0:T(8,128)}', space=vmem, size = 0x1000, scoped, tag = 'scratch operand']
  #allocation4 [shape = 'f32[8,128]{1,0:T(8,128)}', space=vmem, size = 0x1000, scoped, tag = 'scratch operand']
  %s0 = inlined_call_operand.vmem [shape: s32[8,1], index: 0, kind: input, shape index: {}]
  %s1 = inlined_call_operand.hbm [shape: bf16[8,8,128], index: 1, kind: input, shape index: {}]
  %s2 = inlined_call_operand.hbm [shape: bf16[128,512], index: 2, kind: input, shape index: {}]
  %s3 = inlined_call_operand.vmem [shape: f32[1,512], index: 3, kind: input, shape index: {}]
  %s4 = inlined_call_operand.hbm [shape: bf16[128,512], index: 4, kind: input, shape index: {}]
  %s5 = inlined_call_operand.hbm [shape: f32[128,128], index: 5, kind: input, shape index: {}]
  %s6 = inlined_call_operand.vmem [shape: f32[1,128], index: 6, kind: input, shape index: {}]
  %s7 = inlined_call_operand.hbm [shape: f32[8,128], index: 7, kind: output, shape index: {}]
  %s8 = sld [smem:[#allocation0]]
  $region62: #{tpu_custom_call.1} parent=0
    _
  %s10 = ssub.s32 1, %s8
  %s11 = scalar_select 0, %s10, %s8
  $region1: #{tpu_custom_call.1} parent=0
    #allocation5 [shape = 'u8[16384]{0}', space=vmem, size = 0x4000, scoped, tag = 'input window, operand 1, single buffered']
    #allocation6 [shape = 's32[1]{0}', space=sflag, size = 0x4, scoped, tag = 'scoped memory for tpu_custom_call.1']
    #allocation7 [shape = 's32[1]{0}', space=sflag, size = 0x4, scoped, tag = 'scoped memory for tpu_custom_call.1']
    #allocation8 [shape = 'u8[131072]{0}', space=vmem, size = 0x20000, scoped, tag = 'input window, operand 2, single buffered']
    #allocation9 [shape = 's32[1]{0}', space=sflag, size = 0x4, scoped, tag = 'scoped memory for tpu_custom_call.1']
    #allocation10 [shape = 'u8[131072]{0}', space=vmem, size = 0x20000, scoped, tag = 'input window, operand 4, single buffered']
    #allocation11 [shape = 'u8[65536]{0}', space=vmem, size = 0x10000, scoped, tag = 'input window, operand 5, single buffered']
    #allocation12 [shape = 's32[1]{0}', space=sflag, size = 0x4, scoped, tag = 'scoped memory for tpu_custom_call.1']
    #allocation13 [shape = 'u8[4096]{0}', space=vmem, size = 0x1000, scoped, tag = 'output window, operand 0, single buffered']
    %12 = vsyncpa [#allocation6], 0
    %13 = vsyncpa [#allocation9], 0
    %14 = vsyncpa [#allocation12], 0
    %15 = vsyncpa [#allocation7], 0
    // Predicated region
    $region2: #{tpu_custom_call.1} parent=1 // pred_check
      _
    $region3: #{tpu_custom_call.1} parent=1 // pred_check_branch
      %17 = sbr.rel (0) target = $region5
    $region4: #{tpu_custom_call.1} parent=1 // pred_region
      _
    $region5: #{tpu_custom_call.1} parent=1 // pred_fallthru
      _
    // Predicated region
    $region6: #{tpu_custom_call.1} parent=1 // pred_check
      _
    $region7: #{tpu_custom_call.1} parent=1 // pred_check_branch
      %19 = sbr.rel (0) target = $region9
    $region8: #{tpu_custom_call.1} parent=1 // pred_region
      %s21 = ssub.s32 512, 512
      %22 = vsyncadd [#allocation6], %s21
      %s23 = sshll.u32 [#allocation5], 4
      %s24 = int_to_ptr.vmem [resolvable:$true] %s23
      %29 = dma.hbm_to_vmem [thread:$0]  %s1, 512, %s24, [#allocation6], 64, 64, 4
    $region9: #{tpu_custom_call.1} parent=1 // pred_fallthru
      _
    // Predicated region
    $region10: #{tpu_custom_call.1} parent=1 // pred_check
      _
    $region11: #{tpu_custom_call.1} parent=1 // pred_check_branch
      %31 = sbr.rel (0) target = $region13
    $region12: #{tpu_custom_call.1} parent=1 // pred_region
      %s33 = ssub.s32 4096, 4096
      %34 = vsyncadd [#allocation9], %s33
      %s35 = sshll.u32 [#allocation8], 4
      %s36 = int_to_ptr.vmem [resolvable:$true] %s35
      %41 = dma.hbm_to_vmem [thread:$0]  %s2, 4096, %s36, [#allocation9], 256, 256, 16
    $region13: #{tpu_custom_call.1} parent=1 // pred_fallthru
      _
    // Predicated region
    $region14: #{tpu_custom_call.1} parent=1 // pred_check
      _
    $region15: #{tpu_custom_call.1} parent=1 // pred_check_branch
      %43 = sbr.rel (0) target = $region17
    $region16: #{tpu_custom_call.1} parent=1 // pred_region
      _
    $region17: #{tpu_custom_call.1} parent=1 // pred_fallthru
      _
    // Predicated region
    $region18: #{tpu_custom_call.1} parent=1 // pred_check
      _
    $region19: #{tpu_custom_call.1} parent=1 // pred_check_branch
      %45 = sbr.rel (0) target = $region21
    $region20: #{tpu_custom_call.1} parent=1 // pred_region
      %s47 = ssub.s32 4096, 4096
      %48 = vsyncadd [#allocation9], %s47
      %s49 = sshll.u32 [#allocation10], 4
      %s50 = int_to_ptr.vmem [resolvable:$true] %s49
      %55 = dma.hbm_to_vmem [thread:$0]  %s4, 4096, %s50, [#allocation9], 256, 256, 16
    $region21: #{tpu_custom_call.1} parent=1 // pred_fallthru
      _
    // Predicated region
    $region22: #{tpu_custom_call.1} parent=1 // pred_check
      _
    $region23: #{tpu_custom_call.1} parent=1 // pred_check_branch
      %57 = sbr.rel (0) target = $region25
    $region24: #{tpu_custom_call.1} parent=1 // pred_region
      %s59 = ssub.s32 2048, 2048
      %60 = vsyncadd [#allocation12], %s59
      %s61 = sshll.u32 [#allocation11], 4
      %s62 = int_to_ptr.vmem [resolvable:$true] %s61
      %67 = dma.hbm_to_vmem [thread:$0]  %s5, 2048, %s62, [#allocation12], 128, 128, 8
    $region25: #{tpu_custom_call.1} parent=1 // pred_fallthru
      _
    // Predicated region
    $region26: #{tpu_custom_call.1} parent=1 // pred_check
      _
    $region27: #{tpu_custom_call.1} parent=1 // pred_check_branch
      %69 = sbr.rel (0) target = $region29
    $region28: #{tpu_custom_call.1} parent=1 // pred_region
      _
    $region29: #{tpu_custom_call.1} parent=1 // pred_fallthru
      _
    // Predicated region
    $region30: #{tpu_custom_call.1} parent=1 // pred_check
      _
    $region31: #{tpu_custom_call.1} parent=1 // pred_check_branch
      %71 = sbr.rel (0) target = $region33
    $region32: #{tpu_custom_call.1} parent=1 // pred_region
      %72 = dma.done [#allocation6], 512
    $region33: #{tpu_custom_call.1} parent=1 // pred_fallthru
      _
    // Predicated region
    $region34: #{tpu_custom_call.1} parent=1 // pred_check
      _
    $region35: #{tpu_custom_call.1} parent=1 // pred_check_branch
      %74 = sbr.rel (0) target = $region37
    $region36: #{tpu_custom_call.1} parent=1 // pred_region
      %75 = dma.done [#allocation9], 4096
    $region37: #{tpu_custom_call.1} parent=1 // pred_fallthru
      _
    // Predicated region
    $region38: #{tpu_custom_call.1} parent=1 // pred_check
      _
    $region39: #{tpu_custom_call.1} parent=1 // pred_check_branch
      %77 = sbr.rel (0) target = $region41
    $region40: #{tpu_custom_call.1} parent=1 // pred_region
      %78 = dma.done [#allocation9], 4096
    $region41: #{tpu_custom_call.1} parent=1 // pred_fallthru
      _
    // Predicated region
    $region42: #{tpu_custom_call.1} parent=1 // pred_check
      _
    $region43: #{tpu_custom_call.1} parent=1 // pred_check_branch
      %80 = sbr.rel (0) target = $region45
    $region44: #{tpu_custom_call.1} parent=1 // pred_region
      %81 = dma.done [#allocation12], 2048
    $region45: #{tpu_custom_call.1} parent=1 // pred_fallthru
      _
    %p83 = scmp.eq.s32.totalorder 0, 0
    // Predicated region
    $region46: #{tpu_custom_call.1} parent=1 // pred_check
      %p84 = pneg %p83
    $region47: #{tpu_custom_call.1} parent=1 // pred_check_branch
      %86 = sbr.rel (%p84) target = $region49
    $region48: #{tpu_custom_call.1} parent=1 // pred_region
      %87 = vst [vmem:[#allocation3] sm:$0xff] 0.0
      %88 = vst [vmem:[#allocation4] sm:$0xff] 0.0
    $region49: #{tpu_custom_call.1} parent=1 // pred_fallthru
      _
    %v89 = vld [vmem:[#allocation5] sm:$0xf]
    %v90 = vld [vmem:[#allocation5 + $0x4] sm:$0xf]
    %v91 = vld [vmem:[#allocation5 + $0x8] sm:$0xf]
    %v92 = vld [vmem:[#allocation5 + $0xc] sm:$0xf]
    %v93 = vld [vmem:[#allocation5 + $0x10] sm:$0xf]
    %v94 = vld [vmem:[#allocation5 + $0x14] sm:$0xf]
    %v95 = vld [vmem:[#allocation5 + $0x18] sm:$0xf]
    %v96 = vld [vmem:[#allocation5 + $0x1c] sm:$0xf]
    %v97 = vld [vmem:[#allocation8] sm:$0xff]
    %v98 = vld [vmem:[#allocation8 + $0x8] sm:$0xff]
    %v99 = vld [vmem:[#allocation8 + $0x10] sm:$0xff]
    %v100 = vld [vmem:[#allocation8 + $0x18] sm:$0xff]
    %v101 = vld [vmem:[#allocation8 + $0x20] sm:$0xff]
    %v102 = vld [vmem:[#allocation8 + $0x28] sm:$0xff]
    %v103 = vld [vmem:[#allocation8 + $0x30] sm:$0xff]
    %v104 = vld [vmem:[#allocation8 + $0x38] sm:$0xff]
    %v105 = vld [vmem:[#allocation8 + $0x40] sm:$0xff]
    %v106 = vld [vmem:[#allocation8 + $0x48] sm:$0xff]
    %v107 = vld [vmem:[#allocation8 + $0x50] sm:$0xff]
    %v108 = vld [vmem:[#allocation8 + $0x58] sm:$0xff]
    %v109 = vld [vmem:[#allocation8 + $0x60] sm:$0xff]
    %v110 = vld [vmem:[#allocation8 + $0x68] sm:$0xff]
    %v111 = vld [vmem:[#allocation8 + $0x70] sm:$0xff]
    %v112 = vld [vmem:[#allocation8 + $0x78] sm:$0xff]
    %v113 = vld [vmem:[#allocation8 + $0x80] sm:$0xff]
    %v114 = vld [vmem:[#allocation8 + $0x88] sm:$0xff]
    %v115 = vld [vmem:[#allocation8 + $0x90] sm:$0xff]
    %v116 = vld [vmem:[#allocation8 + $0x98] sm:$0xff]
    %v117 = vld [vmem:[#allocation8 + $0xa0] sm:$0xff]
    %v118 = vld [vmem:[#allocation8 + $0xa8] sm:$0xff]
    %v119 = vld [vmem:[#allocation8 + $0xb0] sm:$0xff]
    %v120 = vld [vmem:[#allocation8 + $0xb8] sm:$0xff]
    %v121 = vld [vmem:[#allocation8 + $0xc0] sm:$0xff]
    %v122 = vld [vmem:[#allocation8 + $0xc8] sm:$0xff]
    %v123 = vld [vmem:[#allocation8 + $0xd0] sm:$0xff]
    %v124 = vld [vmem:[#allocation8 + $0xd8] sm:$0xff]
    %v125 = vld [vmem:[#allocation8 + $0xe0] sm:$0xff]
    %v126 = vld [vmem:[#allocation8 + $0xe8] sm:$0xff]
    %v127 = vld [vmem:[#allocation8 + $0xf0] sm:$0xff]
    %v128 = vld [vmem:[#allocation8 + $0xf8] sm:$0xff]
    %v129 = vld [vmem:[%s3] sm:$0xf]
    %v131 = vlaneseq
    %v132 = vshrl.u32 %v131, 7
    %v133 = vsub.s32 0, %v132
    %v134 = vrot.slane %v129, %v133
    %v135 = vlaneseq
    %v136 = vshrl.u32 %v135, 7
    %v137 = vsub.s32 1, %v136
    %v138 = vrot.slane %v129, %v137
    %v139 = vlaneseq
    %v140 = vshrl.u32 %v139, 7
    %v141 = vsub.s32 2, %v140
    %v142 = vrot.slane %v129, %v141
    %v143 = vlaneseq
    %v144 = vshrl.u32 %v143, 7
    %v145 = vsub.s32 3, %v144
    %v146 = vrot.slane %v129, %v145
    %v159 = vunpack.c.l.b16 %v89
    %v160 = vunpack.c.l.b16 %v90
    %v161 = vunpack.c.l.b16 %v91
    %v162 = vunpack.c.l.b16 %v92
    %v163 = vunpack.c.l.b16 %v93
    %v164 = vunpack.c.l.b16 %v94
    %v165 = vunpack.c.l.b16 %v95
    %v166 = vunpack.c.l.b16 %v96
    %v167 = vpack.c.b16 %v160, %v159
    %v168 = vpack.c.b16 %v162, %v161
    %v169 = vpack.c.b16 %v164, %v163
    %v170 = vpack.c.b16 %v166, %v165
    %v207 = vunpack.c.l.b16 %v97
    %v208 = vunpack.c.h.b16 %v97
    %v209 = vunpack.c.l.b16 %v98
    %v210 = vunpack.c.h.b16 %v98
    %v211 = vunpack.c.l.b16 %v99
    %v212 = vunpack.c.h.b16 %v99
    %v213 = vunpack.c.l.b16 %v100
    %v214 = vunpack.c.h.b16 %v100
    %v215 = vunpack.c.l.b16 %v101
    %v216 = vunpack.c.h.b16 %v101
    %v217 = vunpack.c.l.b16 %v102
    %v218 = vunpack.c.h.b16 %v102
    %v219 = vunpack.c.l.b16 %v103
    %v220 = vunpack.c.h.b16 %v103
    %v221 = vunpack.c.l.b16 %v104
    %v222 = vunpack.c.h.b16 %v104
    %v223 = vunpack.c.l.b16 %v105
    %v224 = vunpack.c.h.b16 %v105
    %v225 = vunpack.c.l.b16 %v106
    %v226 = vunpack.c.h.b16 %v106
    %v227 = vunpack.c.l.b16 %v107
    %v228 = vunpack.c.h.b16 %v107
    %v229 = vunpack.c.l.b16 %v108
    %v230 = vunpack.c.h.b16 %v108
    %v231 = vunpack.c.l.b16 %v109
    %v232 = vunpack.c.h.b16 %v109
    %v233 = vunpack.c.l.b16 %v110
    %v234 = vunpack.c.h.b16 %v110
    %v235 = vunpack.c.l.b16 %v111
    %v236 = vunpack.c.h.b16 %v111
    %v237 = vunpack.c.l.b16 %v112
    %v238 = vunpack.c.h.b16 %v112
    %v239 = vunpack.c.l.b16 %v113
    %v240 = vunpack.c.h.b16 %v113
    %v241 = vunpack.c.l.b16 %v114
    %v242 = vunpack.c.h.b16 %v114
    %v243 = vunpack.c.l.b16 %v115
    %v244 = vunpack.c.h.b16 %v115
    %v245 = vunpack.c.l.b16 %v116
    %v246 = vunpack.c.h.b16 %v116
    %v247 = vunpack.c.l.b16 %v117
    %v248 = vunpack.c.h.b16 %v117
    %v249 = vunpack.c.l.b16 %v118
    %v250 = vunpack.c.h.b16 %v118
    %v251 = vunpack.c.l.b16 %v119
    %v252 = vunpack.c.h.b16 %v119
    %v253 = vunpack.c.l.b16 %v120
    %v254 = vunpack.c.h.b16 %v120
    %v255 = vunpack.c.l.b16 %v121
    %v256 = vunpack.c.h.b16 %v121
    %v257 = vunpack.c.l.b16 %v122
    %v258 = vunpack.c.h.b16 %v122
    %v259 = vunpack.c.l.b16 %v123
    %v260 = vunpack.c.h.b16 %v123
    %v261 = vunpack.c.l.b16 %v124
    %v262 = vunpack.c.h.b16 %v124
    %v263 = vunpack.c.l.b16 %v125
    %v264 = vunpack.c.h.b16 %v125
    %v265 = vunpack.c.l.b16 %v126
    %v266 = vunpack.c.h.b16 %v126
    %v267 = vunpack.c.l.b16 %v127
    %v268 = vunpack.c.h.b16 %v127
    %v269 = vunpack.c.l.b16 %v128
    %v270 = vunpack.c.h.b16 %v128
    %v271 = vpack.c.b16 %v211, %v207
    %v272 = vpack.c.b16 %v212, %v208
    %v273 = vpack.c.b16 %v213, %v209
    %v274 = vpack.c.b16 %v214, %v210
    %v275 = vpack.c.b16 %v219, %v215
    %v276 = vpack.c.b16 %v220, %v216
    %v277 = vpack.c.b16 %v221, %v217
    %v278 = vpack.c.b16 %v222, %v218
    %v279 = vpack.c.b16 %v227, %v223
    %v280 = vpack.c.b16 %v228, %v224
    %v281 = vpack.c.b16 %v229, %v225
    %v282 = vpack.c.b16 %v230, %v226
    %v283 = vpack.c.b16 %v235, %v231
    %v284 = vpack.c.b16 %v236, %v232
    %v285 = vpack.c.b16 %v237, %v233
    %v286 = vpack.c.b16 %v238, %v234
    %v287 = vpack.c.b16 %v243, %v239
    %v288 = vpack.c.b16 %v244, %v240
    %v289 = vpack.c.b16 %v245, %v241
    %v290 = vpack.c.b16 %v246, %v242
    %v291 = vpack.c.b16 %v251, %v247
    %v292 = vpack.c.b16 %v252, %v248
    %v293 = vpack.c.b16 %v253, %v249
    %v294 = vpack.c.b16 %v254, %v250
    %v295 = vpack.c.b16 %v259, %v255
    %v296 = vpack.c.b16 %v260, %v256
    %v297 = vpack.c.b16 %v261, %v257
    %v298 = vpack.c.b16 %v262, %v258
    %v299 = vpack.c.b16 %v267, %v263
    %v300 = vpack.c.b16 %v268, %v264
    %v301 = vpack.c.b16 %v269, %v265
    %v302 = vpack.c.b16 %v270, %v266
    %335 = vmatprep.subr.bf16.mxu0 %v272
    %336 = vmatpush1.bf16.msra.mxu0 %v271
    %337 = vmatprep.subr.bf16.mxu0 %v276
    %338 = vmatpush1.bf16.msra.mxu0 %v275
    %339 = vmatprep.subr.bf16.mxu0 %v280
    %340 = vmatpush1.bf16.msra.mxu0 %v279
    %341 = vmatprep.subr.bf16.mxu0 %v284
    %342 = vmatpush1.bf16.msra.mxu0 %v283
    %343 = vmatprep.subr.bf16.mxu0 %v288
    %344 = vmatpush1.bf16.msra.mxu0 %v287
    %345 = vmatprep.subr.bf16.mxu0 %v292
    %346 = vmatpush1.bf16.msra.mxu0 %v291
    %347 = vmatprep.subr.bf16.mxu0 %v296
    %348 = vmatpush1.bf16.msra.mxu0 %v295
    %349 = vmatprep.subr.bf16.mxu0 %v300
    %350 = vmatpush1.bf16.msra.mxu0 %v299
    %351 = vmatprep.subr.bf16.mxu0 0
    %352 = vmatpush1.bf16.msra.mxu0 0
    %353 = vmatprep.subr.bf16.mxu0 0
    %354 = vmatpush1.bf16.msra.mxu0 0
    %355 = vmatprep.subr.bf16.mxu0 0
    %356 = vmatpush1.bf16.msra.mxu0 0
    %357 = vmatprep.subr.bf16.mxu0 0
    %358 = vmatpush1.bf16.msra.mxu0 0
    %359 = vmatprep.subr.bf16.mxu0 0
    %360 = vmatpush1.bf16.msra.mxu0 0
    %361 = vmatprep.subr.bf16.mxu0 0
    %362 = vmatpush1.bf16.msra.mxu0 0
    %363 = vmatprep.subr.bf16.mxu0 0
    %364 = vmatpush1.bf16.msra.mxu0 0
    %365 = vmatprep.subr.bf16.mxu0 0
    %366 = vmatpush1.bf16.msra.mxu0 0
    %367 = vmatprep.mubr.bf16.mxu0 0
    %368 = vmatmul.mubr.bf16.gmra.mrb[0].mxu0 %v167
    %v369 = vpop.f32.mrb[0].mxu0
    %v370 = vadd.f32 %v134, %v369
    %v371 = vpop.f32.mrb[0].mxu0
    %v372 = vadd.f32 %v138, %v371
    %v373 = vpop.f32.mrb[0].mxu0
    %v374 = vadd.f32 %v134, %v373
    %v375 = vpop.f32.mrb[0].mxu0
    %v376 = vadd.f32 %v138, %v375
    %377 = vmatprep.mubr.bf16.mxu0 0
    %378 = vmatmul.mubr.bf16.gmra.mrb[0].mxu0 %v168
    %v379 = vpop.f32.mrb[0].mxu0
    %v380 = vadd.f32 %v134, %v379
    %v381 = vpop.f32.mrb[0].mxu0
    %v382 = vadd.f32 %v138, %v381
    %v383 = vpop.f32.mrb[0].mxu0
    %v384 = vadd.f32 %v134, %v383
    %v385 = vpop.f32.mrb[0].mxu0
    %v386 = vadd.f32 %v138, %v385
    %387 = vmatprep.mubr.bf16.mxu0 0
    %388 = vmatmul.mubr.bf16.gmra.mrb[0].mxu0 %v169
    %v389 = vpop.f32.mrb[0].mxu0
    %v390 = vadd.f32 %v134, %v389
    %v391 = vpop.f32.mrb[0].mxu0
    %v392 = vadd.f32 %v138, %v391
    %v393 = vpop.f32.mrb[0].mxu0
    %v394 = vadd.f32 %v134, %v393
    %v395 = vpop.f32.mrb[0].mxu0
    %v396 = vadd.f32 %v138, %v395
    %397 = vmatprep.mubr.bf16.mxu0 0
    %398 = vmatmul.mubr.bf16.gmra.mrb[0].mxu0 %v170
    %v399 = vpop.f32.mrb[0].mxu0
    %v400 = vadd.f32 %v134, %v399
    %v401 = vpop.f32.mrb[0].mxu0
    %v402 = vadd.f32 %v138, %v401
    %v403 = vpop.f32.mrb[0].mxu0
    %v404 = vadd.f32 %v134, %v403
    %v405 = vpop.f32.mrb[0].mxu0
    %v406 = vadd.f32 %v138, %v405
    %407 = vdwg.mxu0
    %408 = vmatprep.subr.bf16.mxu0 %v274
    %409 = vmatpush1.bf16.msra.mxu0 %v273
    %410 = vmatprep.subr.bf16.mxu0 %v278
    %411 = vmatpush1.bf16.msra.mxu0 %v277
    %412 = vmatprep.subr.bf16.mxu0 %v282
    %413 = vmatpush1.bf16.msra.mxu0 %v281
    %414 = vmatprep.subr.bf16.mxu0 %v286
    %415 = vmatpush1.bf16.msra.mxu0 %v285
    %416 = vmatprep.subr.bf16.mxu0 %v290
    %417 = vmatpush1.bf16.msra.mxu0 %v289
    %418 = vmatprep.subr.bf16.mxu0 %v294
    %419 = vmatpush1.bf16.msra.mxu0 %v293
    %420 = vmatprep.subr.bf16.mxu0 %v298
    %421 = vmatpush1.bf16.msra.mxu0 %v297
    %422 = vmatprep.subr.bf16.mxu0 %v302
    %423 = vmatpush1.bf16.msra.mxu0 %v301
    %424 = vmatprep.subr.bf16.mxu0 0
    %425 = vmatpush1.bf16.msra.mxu0 0
    %426 = vmatprep.subr.bf16.mxu0 0
    %427 = vmatpush1.bf16.msra.mxu0 0
    %428 = vmatprep.subr.bf16.mxu0 0
    %429 = vmatpush1.bf16.msra.mxu0 0
    %430 = vmatprep.subr.bf16.mxu0 0
    %431 = vmatpush1.bf16.msra.mxu0 0
    %432 = vmatprep.subr.bf16.mxu0 0
    %433 = vmatpush1.bf16.msra.mxu0 0
    %434 = vmatprep.subr.bf16.mxu0 0
    %435 = vmatpush1.bf16.msra.mxu0 0
    %436 = vmatprep.subr.bf16.mxu0 0
    %437 = vmatpush1.bf16.msra.mxu0 0
    %438 = vmatprep.subr.bf16.mxu0 0
    %439 = vmatpush1.bf16.msra.mxu0 0
    %440 = vmatprep.mubr.bf16.mxu0 0
    %441 = vmatmul.mubr.bf16.gmra.mrb[0].mxu0 %v167
    %v442 = vpop.f32.mrb[0].mxu0
    %v443 = vadd.f32 %v142, %v442
    %v444 = vpop.f32.mrb[0].mxu0
    %v445 = vadd.f32 %v146, %v444
    %v446 = vpop.f32.mrb[0].mxu0
    %v447 = vadd.f32 %v142, %v446
    %v448 = vpop.f32.mrb[0].mxu0
    %v449 = vadd.f32 %v146, %v448
    %450 = vmatprep.mubr.bf16.mxu0 0
    %451 = vmatmul.mubr.bf16.gmra.mrb[0].mxu0 %v168
    %v452 = vpop.f32.mrb[0].mxu0
    %v453 = vadd.f32 %v142, %v452
    %v454 = vpop.f32.mrb[0].mxu0
    %v455 = vadd.f32 %v146, %v454
    %v456 = vpop.f32.mrb[0].mxu0
    %v457 = vadd.f32 %v142, %v456
    %v458 = vpop.f32.mrb[0].mxu0
    %v459 = vadd.f32 %v146, %v458
    %460 = vmatprep.mubr.bf16.mxu0 0
    %461 = vmatmul.mubr.bf16.gmra.mrb[0].mxu0 %v169
    %v462 = vpop.f32.mrb[0].mxu0
    %v463 = vadd.f32 %v142, %v462
    %v464 = vpop.f32.mrb[0].mxu0
    %v465 = vadd.f32 %v146, %v464
    %v466 = vpop.f32.mrb[0].mxu0
    %v467 = vadd.f32 %v142, %v466
    %v468 = vpop.f32.mrb[0].mxu0
    %v469 = vadd.f32 %v146, %v468
    %470 = vmatprep.mubr.bf16.mxu0 0
    %471 = vmatmul.mubr.bf16.gmra.mrb[0].mxu0 %v170
    %v472 = vpop.f32.mrb[0].mxu0
    %v473 = vadd.f32 %v142, %v472
    %v474 = vpop.f32.mrb[0].mxu0
    %v475 = vadd.f32 %v146, %v474
    %v476 = vpop.f32.mrb[0].mxu0
    %v477 = vadd.f32 %v142, %v476
    %v478 = vpop.f32.mrb[0].mxu0
    %v479 = vadd.f32 %v146, %v478
    %480 = vdwg.mxu0
    %481 = vst [vmem:[#allocation2] sm:$0xff] %v370
    %482 = vst [vmem:[#allocation2 + $0x8] sm:$0xff] %v372
    %483 = vst [vmem:[#allocation2 + $0x10] sm:$0xff] %v443
    %484 = vst [vmem:[#allocation2 + $0x18] sm:$0xff] %v445
    %485 = vst [vmem:[#allocation2 + $0x20] sm:$0xff] %v374
    %486 = vst [vmem:[#allocation2 + $0x28] sm:$0xff] %v376
    %487 = vst [vmem:[#allocation2 + $0x30] sm:$0xff] %v447
    %488 = vst [vmem:[#allocation2 + $0x38] sm:$0xff] %v449
    %489 = vst [vmem:[#allocation2 + $0x40] sm:$0xff] %v380
    %490 = vst [vmem:[#allocation2 + $0x48] sm:$0xff] %v382
    %491 = vst [vmem:[#allocation2 + $0x50] sm:$0xff] %v453
    %492 = vst [vmem:[#allocation2 + $0x58] sm:$0xff] %v455
    %493 = vst [vmem:[#allocation2 + $0x60] sm:$0xff] %v384
    %494 = vst [vmem:[#allocation2 + $0x68] sm:$0xff] %v386
    %495 = vst [vmem:[#allocation2 + $0x70] sm:$0xff] %v457
    %496 = vst [vmem:[#allocation2 + $0x78] sm:$0xff] %v459
    %497 = vst [vmem:[#allocation2 + $0x80] sm:$0xff] %v390
    %498 = vst [vmem:[#allocation2 + $0x88] sm:$0xff] %v392
    %499 = vst [vmem:[#allocation2 + $0x90] sm:$0xff] %v463
    %500 = vst [vmem:[#allocation2 + $0x98] sm:$0xff] %v465
    %501 = vst [vmem:[#allocation2 + $0xa0] sm:$0xff] %v394
    %502 = vst [vmem:[#allocation2 + $0xa8] sm:$0xff] %v396
    %503 = vst [vmem:[#allocation2 + $0xb0] sm:$0xff] %v467
    %504 = vst [vmem:[#allocation2 + $0xb8] sm:$0xff] %v469
    %505 = vst [vmem:[#allocation2 + $0xc0] sm:$0xff] %v400
    %506 = vst [vmem:[#allocation2 + $0xc8] sm:$0xff] %v402
    %507 = vst [vmem:[#allocation2 + $0xd0] sm:$0xff] %v473
    %508 = vst [vmem:[#allocation2 + $0xd8] sm:$0xff] %v475
    %509 = vst [vmem:[#allocation2 + $0xe0] sm:$0xff] %v404
    %510 = vst [vmem:[#allocation2 + $0xe8] sm:$0xff] %v406
    %511 = vst [vmem:[#allocation2 + $0xf0] sm:$0xff] %v477
    %512 = vst [vmem:[#allocation2 + $0xf8] sm:$0xff] %v479
    %v513 = vld [vmem:[#allocation10] sm:$0xff]
    %v514 = vld [vmem:[#allocation10 + $0x8] sm:$0xff]
    %v515 = vld [vmem:[#allocation10 + $0x10] sm:$0xff]
    %v516 = vld [vmem:[#allocation10 + $0x18] sm:$0xff]
    %v517 = vld [vmem:[#allocation10 + $0x20] sm:$0xff]
    %v518 = vld [vmem:[#allocation10 + $0x28] sm:$0xff]
    %v519 = vld [vmem:[#allocation10 + $0x30] sm:$0xff]
    %v520 = vld [vmem:[#allocation10 + $0x38] sm:$0xff]
    %v521 = vld [vmem:[#allocation10 + $0x40] sm:$0xff]
    %v522 = vld [vmem:[#allocation10 + $0x48] sm:$0xff]
    %v523 = vld [vmem:[#allocation10 + $0x50] sm:$0xff]
    %v524 = vld [vmem:[#allocation10 + $0x58] sm:$0xff]
    %v525 = vld [vmem:[#allocation10 + $0x60] sm:$0xff]
    %v526 = vld [vmem:[#allocation10 + $0x68] sm:$0xff]
    %v527 = vld [vmem:[#allocation10 + $0x70] sm:$0xff]
    %v528 = vld [vmem:[#allocation10 + $0x78] sm:$0xff]
    %v529 = vld [vmem:[#allocation10 + $0x80] sm:$0xff]
    %v530 = vld [vmem:[#allocation10 + $0x88] sm:$0xff]
    %v531 = vld [vmem:[#allocation10 + $0x90] sm:$0xff]
    %v532 = vld [vmem:[#allocation10 + $0x98] sm:$0xff]
    %v533 = vld [vmem:[#allocation10 + $0xa0] sm:$0xff]
    %v534 = vld [vmem:[#allocation10 + $0xa8] sm:$0xff]
    %v535 = vld [vmem:[#allocation10 + $0xb0] sm:$0xff]
    %v536 = vld [vmem:[#allocation10 + $0xb8] sm:$0xff]
    %v537 = vld [vmem:[#allocation10 + $0xc0] sm:$0xff]
    %v538 = vld [vmem:[#allocation10 + $0xc8] sm:$0xff]
    %v539 = vld [vmem:[#allocation10 + $0xd0] sm:$0xff]
    %v540 = vld [vmem:[#allocation10 + $0xd8] sm:$0xff]
    %v541 = vld [vmem:[#allocation10 + $0xe0] sm:$0xff]
    %v542 = vld [vmem:[#allocation10 + $0xe8] sm:$0xff]
    %v543 = vld [vmem:[#allocation10 + $0xf0] sm:$0xff]
    %v544 = vld [vmem:[#allocation10 + $0xf8] sm:$0xff]
    %v545 = vld [vmem:[%s0] sm:$0xff]
    %546 = vset.pattern.permute.xlu0 0
    %547 = vperm.xlu0 %546, %v545
    %v548 = vpop.permute.xlu0 %547
    %s549 = smul.u32 0, 8
    %v550 = vld [vmem:[#allocation3] sm:$0xff]
    %v551 = vld [vmem:[#allocation4] sm:$0xff]
    %v552 = vld [vmem:[#allocation2] sm:$0xff]
    %v553 = vld [vmem:[#allocation2 + $0x8] sm:$0xff]
    %v554 = vld [vmem:[#allocation2 + $0x10] sm:$0xff]
    %v555 = vld [vmem:[#allocation2 + $0x18] sm:$0xff]
    %v556 = vpack.c.bf16 %v550, %v550
    %v589 = vunpack.c.l.b16 %v513
    %v590 = vunpack.c.h.b16 %v513
    %v591 = vunpack.c.l.b16 %v514
    %v592 = vunpack.c.h.b16 %v514
    %v593 = vunpack.c.l.b16 %v515
    %v594 = vunpack.c.h.b16 %v515
    %v595 = vunpack.c.l.b16 %v516
    %v596 = vunpack.c.h.b16 %v516
    %v597 = vunpack.c.l.b16 %v517
    %v598 = vunpack.c.h.b16 %v517
    %v599 = vunpack.c.l.b16 %v518
    %v600 = vunpack.c.h.b16 %v518
    %v601 = vunpack.c.l.b16 %v519
    %v602 = vunpack.c.h.b16 %v519
    %v603 = vunpack.c.l.b16 %v520
    %v604 = vunpack.c.h.b16 %v520
    %v605 = vunpack.c.l.b16 %v521
    %v606 = vunpack.c.h.b16 %v521
    %v607 = vunpack.c.l.b16 %v522
    %v608 = vunpack.c.h.b16 %v522
    %v609 = vunpack.c.l.b16 %v523
    %v610 = vunpack.c.h.b16 %v523
    %v611 = vunpack.c.l.b16 %v524
    %v612 = vunpack.c.h.b16 %v524
    %v613 = vunpack.c.l.b16 %v525
    %v614 = vunpack.c.h.b16 %v525
    %v615 = vunpack.c.l.b16 %v526
    %v616 = vunpack.c.h.b16 %v526
    %v617 = vunpack.c.l.b16 %v527
    %v618 = vunpack.c.h.b16 %v527
    %v619 = vunpack.c.l.b16 %v528
    %v620 = vunpack.c.h.b16 %v528
    %v621 = vunpack.c.l.b16 %v529
    %v622 = vunpack.c.h.b16 %v529
    %v623 = vunpack.c.l.b16 %v530
    %v624 = vunpack.c.h.b16 %v530
    %v625 = vunpack.c.l.b16 %v531
    %v626 = vunpack.c.h.b16 %v531
    %v627 = vunpack.c.l.b16 %v532
    %v628 = vunpack.c.h.b16 %v532
    %v629 = vunpack.c.l.b16 %v533
    %v630 = vunpack.c.h.b16 %v533
    %v631 = vunpack.c.l.b16 %v534
    %v632 = vunpack.c.h.b16 %v534
    %v633 = vunpack.c.l.b16 %v535
    %v634 = vunpack.c.h.b16 %v535
    %v635 = vunpack.c.l.b16 %v536
    %v636 = vunpack.c.h.b16 %v536
    %v637 = vunpack.c.l.b16 %v537
    %v638 = vunpack.c.h.b16 %v537
    %v639 = vunpack.c.l.b16 %v538
    %v640 = vunpack.c.h.b16 %v538
    %v641 = vunpack.c.l.b16 %v539
    %v642 = vunpack.c.h.b16 %v539
    %v643 = vunpack.c.l.b16 %v540
    %v644 = vunpack.c.h.b16 %v540
    %v645 = vunpack.c.l.b16 %v541
    %v646 = vunpack.c.h.b16 %v541
    %v647 = vunpack.c.l.b16 %v542
    %v648 = vunpack.c.h.b16 %v542
    %v649 = vunpack.c.l.b16 %v543
    %v650 = vunpack.c.h.b16 %v543
    %v651 = vunpack.c.l.b16 %v544
    %v652 = vunpack.c.h.b16 %v544
    %v653 = vpack.c.b16 %v593, %v589
    %v654 = vpack.c.b16 %v594, %v590
    %v655 = vpack.c.b16 %v595, %v591
    %v656 = vpack.c.b16 %v596, %v592
    %v657 = vpack.c.b16 %v601, %v597
    %v658 = vpack.c.b16 %v602, %v598
    %v659 = vpack.c.b16 %v603, %v599
    %v660 = vpack.c.b16 %v604, %v600
    %v661 = vpack.c.b16 %v609, %v605
    %v662 = vpack.c.b16 %v610, %v606
    %v663 = vpack.c.b16 %v611, %v607
    %v664 = vpack.c.b16 %v612, %v608
    %v665 = vpack.c.b16 %v617, %v613
    %v666 = vpack.c.b16 %v618, %v614
    %v667 = vpack.c.b16 %v619, %v615
    %v668 = vpack.c.b16 %v620, %v616
    %v669 = vpack.c.b16 %v625, %v621
    %v670 = vpack.c.b16 %v626, %v622
    %v671 = vpack.c.b16 %v627, %v623
    %v672 = vpack.c.b16 %v628, %v624
    %v673 = vpack.c.b16 %v633, %v629
    %v674 = vpack.c.b16 %v634, %v630
    %v675 = vpack.c.b16 %v635, %v631
    %v676 = vpack.c.b16 %v636, %v632
    %v677 = vpack.c.b16 %v641, %v637
    %v678 = vpack.c.b16 %v642, %v638
    %v679 = vpack.c.b16 %v643, %v639
    %v680 = vpack.c.b16 %v644, %v640
    %v681 = vpack.c.b16 %v649, %v645
    %v682 = vpack.c.b16 %v650, %v646
    %v683 = vpack.c.b16 %v651, %v647
    %v684 = vpack.c.b16 %v652, %v648
    %717 = vmatprep.subr.bf16.mxu0 %v654
    %718 = vmatpush1.bf16.msra.mxu0 %v653
    %719 = vmatprep.subr.bf16.mxu0 %v658
    %720 = vmatpush1.bf16.msra.mxu0 %v657
    %721 = vmatprep.subr.bf16.mxu0 %v662
    %722 = vmatpush1.bf16.msra.mxu0 %v661
    %723 = vmatprep.subr.bf16.mxu0 %v666
    %724 = vmatpush1.bf16.msra.mxu0 %v665
    %725 = vmatprep.subr.bf16.mxu0 %v670
    %726 = vmatpush1.bf16.msra.mxu0 %v669
    %727 = vmatprep.subr.bf16.mxu0 %v674
    %728 = vmatpush1.bf16.msra.mxu0 %v673
    %729 = vmatprep.subr.bf16.mxu0 %v678
    %730 = vmatpush1.bf16.msra.mxu0 %v677
    %731 = vmatprep.subr.bf16.mxu0 %v682
    %732 = vmatpush1.bf16.msra.mxu0 %v681
    %733 = vmatprep.subr.bf16.mxu0 0
    %734 = vmatpush1.bf16.msra.mxu0 0
    %735 = vmatprep.subr.bf16.mxu0 0
    %736 = vmatpush1.bf16.msra.mxu0 0
    %737 = vmatprep.subr.bf16.mxu0 0
    %738 = vmatpush1.bf16.msra.mxu0 0
    %739 = vmatprep.subr.bf16.mxu0 0
    %740 = vmatpush1.bf16.msra.mxu0 0
    %741 = vmatprep.subr.bf16.mxu0 0
    %742 = vmatpush1.bf16.msra.mxu0 0
    %743 = vmatprep.subr.bf16.mxu0 0
    %744 = vmatpush1.bf16.msra.mxu0 0
    %745 = vmatprep.subr.bf16.mxu0 0
    %746 = vmatpush1.bf16.msra.mxu0 0
    %747 = vmatprep.subr.bf16.mxu0 0
    %748 = vmatpush1.bf16.msra.mxu0 0
    %749 = vmatprep.mubr.bf16.mxu0 0
    %750 = vmatmul.mubr.bf16.gmra.mrb[0].mxu0 %v556
    %v751 = vpop.f32.mrb[0].mxu0
    %v752 = vadd.f32 0.0, %v751
    %v753 = vpop.f32.mrb[0].mxu0
    %v754 = vadd.f32 0.0, %v753
    %v755 = vpop.f32.mrb[0].mxu0
    %v756 = vpop.f32.mrb[0].mxu0
    %757 = vdwg.mxu0
    %758 = vmatprep.subr.bf16.mxu0 %v656
    %759 = vmatpush1.bf16.msra.mxu0 %v655
    %760 = vmatprep.subr.bf16.mxu0 %v660
    %761 = vmatpush1.bf16.msra.mxu0 %v659
    %762 = vmatprep.subr.bf16.mxu0 %v664
    %763 = vmatpush1.bf16.msra.mxu0 %v663
    %764 = vmatprep.subr.bf16.mxu0 %v668
    %765 = vmatpush1.bf16.msra.mxu0 %v667
    %766 = vmatprep.subr.bf16.mxu0 %v672
    %767 = vmatpush1.bf16.msra.mxu0 %v671
    %768 = vmatprep.subr.bf16.mxu0 %v676
    %769 = vmatpush1.bf16.msra.mxu0 %v675
    %770 = vmatprep.subr.bf16.mxu0 %v680
    %771 = vmatpush1.bf16.msra.mxu0 %v679
    %772 = vmatprep.subr.bf16.mxu0 %v684
    %773 = vmatpush1.bf16.msra.mxu0 %v683
    %774 = vmatprep.subr.bf16.mxu0 0
    %775 = vmatpush1.bf16.msra.mxu0 0
    %776 = vmatprep.subr.bf16.mxu0 0
    %777 = vmatpush1.bf16.msra.mxu0 0
    %778 = vmatprep.subr.bf16.mxu0 0
    %779 = vmatpush1.bf16.msra.mxu0 0
    %780 = vmatprep.subr.bf16.mxu0 0
    %781 = vmatpush1.bf16.msra.mxu0 0
    %782 = vmatprep.subr.bf16.mxu0 0
    %783 = vmatpush1.bf16.msra.mxu0 0
    %784 = vmatprep.subr.bf16.mxu0 0
    %785 = vmatpush1.bf16.msra.mxu0 0
    %786 = vmatprep.subr.bf16.mxu0 0
    %787 = vmatpush1.bf16.msra.mxu0 0
    %788 = vmatprep.subr.bf16.mxu0 0
    %789 = vmatpush1.bf16.msra.mxu0 0
    %790 = vmatprep.mubr.bf16.mxu0 0
    %791 = vmatmul.mubr.bf16.gmra.mrb[0].mxu0 %v556
    %v792 = vpop.f32.mrb[0].mxu0
    %v793 = vadd.f32 0.0, %v792
    %v794 = vpop.f32.mrb[0].mxu0
    %v795 = vadd.f32 0.0, %v794
    %v796 = vpop.f32.mrb[0].mxu0
    %v797 = vpop.f32.mrb[0].mxu0
    %798 = vdwg.mxu0
    %v799 = vadd.f32 %v552, %v752
    %v800 = vadd.f32 %v553, %v754
    %v801 = vadd.f32 %v554, %v793
    %v802 = vadd.f32 %v555, %v795
    %v803 = vxor.u32 %v799, 2147483648
    %v804 = vmul.f32 %v803, 1.442695
    %v805 = vpow.pop %v804
    %v806 = vadd.f32 %v805, 1.0
    %v807 = vrcp.pop %v806
    %v808 = vmul.f32 1.0, %v807
    %v809 = vxor.u32 %v800, 2147483648
    %v810 = vmul.f32 %v809, 1.442695
    %v811 = vpow.pop %v810
    %v812 = vadd.f32 %v811, 1.0
    %v813 = vrcp.pop %v812
    %v814 = vmul.f32 1.0, %v813
    %v815 = vtanh.pop %v801
    %v816 = vxor.u32 %v802, 2147483648
    %v817 = vmul.f32 %v816, 1.442695
    %v818 = vpow.pop %v817
    %v819 = vadd.f32 %v818, 1.0
    %v820 = vrcp.pop %v819
    %v821 = vmul.f32 1.0, %v820
    %v822 = vmul.f32 %v814, %v551
    %v823 = vmul.f32 %v808, %v815
    %v824 = vadd.f32 %v822, %v823
    %v825 = vtanh.pop %v824
    %v826 = vmul.f32 %v821, %v825
    %v827 = vstv %s549
    %vm828 = vcmp.lt.s32.totalorder %v827, %v548
    %v829 = vsel %vm828, %v826, %v550
    %v830 = vsel %vm828, %v824, %v551
    %s831 = scalar_lea.vmem [#allocation2], 32
    %v832 = vld [vmem:[%s831] sm:$0xff]
    %v833 = vld [vmem:[%s831 + $0x8] sm:$0xff]
    %v834 = vld [vmem:[%s831 + $0x10] sm:$0xff]
    %v835 = vld [vmem:[%s831 + $0x18] sm:$0xff]
    %v836 = vpack.c.bf16 %v829, %v829
    %837 = vmatprep.subr.bf16.mxu0 %v654
    %838 = vmatpush1.bf16.msra.mxu0 %v653
    %839 = vmatprep.subr.bf16.mxu0 %v658
    %840 = vmatpush1.bf16.msra.mxu0 %v657
    %841 = vmatprep.subr.bf16.mxu0 %v662
    %842 = vmatpush1.bf16.msra.mxu0 %v661
    %843 = vmatprep.subr.bf16.mxu0 %v666
    %844 = vmatpush1.bf16.msra.mxu0 %v665
    %845 = vmatprep.subr.bf16.mxu0 %v670
    %846 = vmatpush1.bf16.msra.mxu0 %v669
    %847 = vmatprep.subr.bf16.mxu0 %v674
    %848 = vmatpush1.bf16.msra.mxu0 %v673
    %849 = vmatprep.subr.bf16.mxu0 %v678
    %850 = vmatpush1.bf16.msra.mxu0 %v677
    %851 = vmatprep.subr.bf16.mxu0 %v682
    %852 = vmatpush1.bf16.msra.mxu0 %v681
    %853 = vmatprep.subr.bf16.mxu0 0
    %854 = vmatpush1.bf16.msra.mxu0 0
    %855 = vmatprep.subr.bf16.mxu0 0
    %856 = vmatpush1.bf16.msra.mxu0 0
    %857 = vmatprep.subr.bf16.mxu0 0
    %858 = vmatpush1.bf16.msra.mxu0 0
    %859 = vmatprep.subr.bf16.mxu0 0
    %860 = vmatpush1.bf16.msra.mxu0 0
    %861 = vmatprep.subr.bf16.mxu0 0
    %862 = vmatpush1.bf16.msra.mxu0 0
    %863 = vmatprep.subr.bf16.mxu0 0
    %864 = vmatpush1.bf16.msra.mxu0 0
    %865 = vmatprep.subr.bf16.mxu0 0
    %866 = vmatpush1.bf16.msra.mxu0 0
    %867 = vmatprep.subr.bf16.mxu0 0
    %868 = vmatpush1.bf16.msra.mxu0 0
    %869 = vmatprep.mubr.bf16.mxu0 0
    %870 = vmatmul.mubr.bf16.gmra.mrb[0].mxu0 %v836
    %v871 = vpop.f32.mrb[0].mxu0
    %v872 = vadd.f32 0.0, %v871
    %v873 = vpop.f32.mrb[0].mxu0
    %v874 = vadd.f32 0.0, %v873
    %v875 = vpop.f32.mrb[0].mxu0
    %v876 = vpop.f32.mrb[0].mxu0
    %877 = vdwg.mxu0
    %878 = vmatprep.subr.bf16.mxu0 %v656
    %879 = vmatpush1.bf16.msra.mxu0 %v655
    %880 = vmatprep.subr.bf16.mxu0 %v660
    %881 = vmatpush1.bf16.msra.mxu0 %v659
    %882 = vmatprep.subr.bf16.mxu0 %v664
    %883 = vmatpush1.bf16.msra.mxu0 %v663
    %884 = vmatprep.subr.bf16.mxu0 %v668
    %885 = vmatpush1.bf16.msra.mxu0 %v667
    %886 = vmatprep.subr.bf16.mxu0 %v672
    %887 = vmatpush1.bf16.msra.mxu0 %v671
    %888 = vmatprep.subr.bf16.mxu0 %v676
    %889 = vmatpush1.bf16.msra.mxu0 %v675
    %890 = vmatprep.subr.bf16.mxu0 %v680
    %891 = vmatpush1.bf16.msra.mxu0 %v679
    %892 = vmatprep.subr.bf16.mxu0 %v684
    %893 = vmatpush1.bf16.msra.mxu0 %v683
    %894 = vmatprep.subr.bf16.mxu0 0
    %895 = vmatpush1.bf16.msra.mxu0 0
    %896 = vmatprep.subr.bf16.mxu0 0
    %897 = vmatpush1.bf16.msra.mxu0 0
    %898 = vmatprep.subr.bf16.mxu0 0
    %899 = vmatpush1.bf16.msra.mxu0 0
    %900 = vmatprep.subr.bf16.mxu0 0
    %901 = vmatpush1.bf16.msra.mxu0 0
    %902 = vmatprep.subr.bf16.mxu0 0
    %903 = vmatpush1.bf16.msra.mxu0 0
    %904 = vmatprep.subr.bf16.mxu0 0
    %905 = vmatpush1.bf16.msra.mxu0 0
    %906 = vmatprep.subr.bf16.mxu0 0
    %907 = vmatpush1.bf16.msra.mxu0 0
    %908 = vmatprep.subr.bf16.mxu0 0
    %909 = vmatpush1.bf16.msra.mxu0 0
    %910 = vmatprep.mubr.bf16.mxu0 0
    %911 = vmatmul.mubr.bf16.gmra.mrb[0].mxu0 %v836
    %v912 = vpop.f32.mrb[0].mxu0
    %v913 = vadd.f32 0.0, %v912
    %v914 = vpop.f32.mrb[0].mxu0
    %v915 = vadd.f32 0.0, %v914
    %v916 = vpop.f32.mrb[0].mxu0
    %v917 = vpop.f32.mrb[0].mxu0
    %918 = vdwg.mxu0
    %v919 = vadd.f32 %v832, %v872
    %v920 = vadd.f32 %v833, %v874
    %v921 = vadd.f32 %v834, %v913
    %v922 = vadd.f32 %v835, %v915
    %v923 = vxor.u32 %v919, 2147483648
    %v924 = vmul.f32 %v923, 1.442695
    %v925 = vpow.pop %v924
    %v926 = vadd.f32 %v925, 1.0
    %v927 = vrcp.pop %v926
    %v928 = vmul.f32 1.0, %v927
    %v929 = vxor.u32 %v920, 2147483648
    %v930 = vmul.f32 %v929, 1.442695
    %v931 = vpow.pop %v930
    %v932 = vadd.f32 %v931, 1.0
    %v933 = vrcp.pop %v932
    %v934 = vmul.f32 1.0, %v933
    %v935 = vtanh.pop %v921
    %v936 = vxor.u32 %v922, 2147483648
    %v937 = vmul.f32 %v936, 1.442695
    %v938 = vpow.pop %v937
    %v939 = vadd.f32 %v938, 1.0
    %v940 = vrcp.pop %v939
    %v941 = vmul.f32 1.0, %v940
    %v942 = vmul.f32 %v934, %v830
    %v943 = vmul.f32 %v928, %v935
    %v944 = vadd.f32 %v942, %v943
    %v945 = vtanh.pop %v944
    %v946 = vmul.f32 %v941, %v945
    %s947 = sadd.s32 %s549, 1
    %v948 = vstv %s947
    %vm949 = vcmp.lt.s32.totalorder %v948, %v548
    %v950 = vsel %vm949, %v946, %v829
    %v951 = vsel %vm949, %v944, %v830
    %s952 = scalar_lea.vmem [#allocation2], 64
    %v953 = vld [vmem:[%s952] sm:$0xff]
    %v954 = vld [vmem:[%s952 + $0x8] sm:$0xff]
    %v955 = vld [vmem:[%s952 + $0x10] sm:$0xff]
    %v956 = vld [vmem:[%s952 + $0x18] sm:$0xff]
    %v957 = vpack.c.bf16 %v950, %v950
    %958 = vmatprep.subr.bf16.mxu0 %v654
    %959 = vmatpush1.bf16.msra.mxu0 %v653
    %960 = vmatprep.subr.bf16.mxu0 %v658
    %961 = vmatpush1.bf16.msra.mxu0 %v657
    %962 = vmatprep.subr.bf16.mxu0 %v662
    %963 = vmatpush1.bf16.msra.mxu0 %v661
    %964 = vmatprep.subr.bf16.mxu0 %v666
    %965 = vmatpush1.bf16.msra.mxu0 %v665
    %966 = vmatprep.subr.bf16.mxu0 %v670
    %967 = vmatpush1.bf16.msra.mxu0 %v669
    %968 = vmatprep.subr.bf16.mxu0 %v674
    %969 = vmatpush1.bf16.msra.mxu0 %v673
    %970 = vmatprep.subr.bf16.mxu0 %v678
    %971 = vmatpush1.bf16.msra.mxu0 %v677
    %972 = vmatprep.subr.bf16.mxu0 %v682
    %973 = vmatpush1.bf16.msra.mxu0 %v681
    %974 = vmatprep.subr.bf16.mxu0 0
    %975 = vmatpush1.bf16.msra.mxu0 0
    %976 = vmatprep.subr.bf16.mxu0 0
    %977 = vmatpush1.bf16.msra.mxu0 0
    %978 = vmatprep.subr.bf16.mxu0 0
    %979 = vmatpush1.bf16.msra.mxu0 0
    %980 = vmatprep.subr.bf16.mxu0 0
    %981 = vmatpush1.bf16.msra.mxu0 0
    %982 = vmatprep.subr.bf16.mxu0 0
    %983 = vmatpush1.bf16.msra.mxu0 0
    %984 = vmatprep.subr.bf16.mxu0 0
    %985 = vmatpush1.bf16.msra.mxu0 0
    %986 = vmatprep.subr.bf16.mxu0 0
    %987 = vmatpush1.bf16.msra.mxu0 0
    %988 = vmatprep.subr.bf16.mxu0 0
    %989 = vmatpush1.bf16.msra.mxu0 0
    %990 = vmatprep.mubr.bf16.mxu0 0
    %991 = vmatmul.mubr.bf16.gmra.mrb[0].mxu0 %v957
    %v992 = vpop.f32.mrb[0].mxu0
    %v993 = vadd.f32 0.0, %v992
    %v994 = vpop.f32.mrb[0].mxu0
    %v995 = vadd.f32 0.0, %v994
    %v996 = vpop.f32.mrb[0].mxu0
    %v997 = vpop.f32.mrb[0].mxu0
    %998 = vdwg.mxu0
    %999 = vmatprep.subr.bf16.mxu0 %v656
    %1000 = vmatpush1.bf16.msra.mxu0 %v655
    %1001 = vmatprep.subr.bf16.mxu0 %v660
    %1002 = vmatpush1.bf16.msra.mxu0 %v659
    %1003 = vmatprep.subr.bf16.mxu0 %v664
    %1004 = vmatpush1.bf16.msra.mxu0 %v663
    %1005 = vmatprep.subr.bf16.mxu0 %v668
    %1006 = vmatpush1.bf16.msra.mxu0 %v667
    %1007 = vmatprep.subr.bf16.mxu0 %v672
    %1008 = vmatpush1.bf16.msra.mxu0 %v671
    %1009 = vmatprep.subr.bf16.mxu0 %v676
    %1010 = vmatpush1.bf16.msra.mxu0 %v675
    %1011 = vmatprep.subr.bf16.mxu0 %v680
    %1012 = vmatpush1.bf16.msra.mxu0 %v679
    %1013 = vmatprep.subr.bf16.mxu0 %v684
    %1014 = vmatpush1.bf16.msra.mxu0 %v683
    %1015 = vmatprep.subr.bf16.mxu0 0
    %1016 = vmatpush1.bf16.msra.mxu0 0
    %1017 = vmatprep.subr.bf16.mxu0 0
    %1018 = vmatpush1.bf16.msra.mxu0 0
    %1019 = vmatprep.subr.bf16.mxu0 0
    %1020 = vmatpush1.bf16.msra.mxu0 0
    %1021 = vmatprep.subr.bf16.mxu0 0
    %1022 = vmatpush1.bf16.msra.mxu0 0
    %1023 = vmatprep.subr.bf16.mxu0 0
    %1024 = vmatpush1.bf16.msra.mxu0 0
    %1025 = vmatprep.subr.bf16.mxu0 0
    %1026 = vmatpush1.bf16.msra.mxu0 0
    %1027 = vmatprep.subr.bf16.mxu0 0
    %1028 = vmatpush1.bf16.msra.mxu0 0
    %1029 = vmatprep.subr.bf16.mxu0 0
    %1030 = vmatpush1.bf16.msra.mxu0 0
    %1031 = vmatprep.mubr.bf16.mxu0 0
    %1032 = vmatmul.mubr.bf16.gmra.mrb[0].mxu0 %v957
    %v1033 = vpop.f32.mrb[0].mxu0
    %v1034 = vadd.f32 0.0, %v1033
    %v1035 = vpop.f32.mrb[0].mxu0
    %v1036 = vadd.f32 0.0, %v1035
    %v1037 = vpop.f32.mrb[0].mxu0
    %v1038 = vpop.f32.mrb[0].mxu0
    %1039 = vdwg.mxu0
    %v1040 = vadd.f32 %v953, %v993
    %v1041 = vadd.f32 %v954, %v995
    %v1042 = vadd.f32 %v955, %v1034
    %v1043 = vadd.f32 %v956, %v1036
    %v1044 = vxor.u32 %v1040, 2147483648
    %v1045 = vmul.f32 %v1044, 1.442695
    %v1046 = vpow.pop %v1045
    %v1047 = vadd.f32 %v1046, 1.0
    %v1048 = vrcp.pop %v1047
    %v1049 = vmul.f32 1.0, %v1048
    %v1050 = vxor.u32 %v1041, 2147483648
    %v1051 = vmul.f32 %v1050, 1.442695
    %v1052 = vpow.pop %v1051
    %v1053 = vadd.f32 %v1052, 1.0
    %v1054 = vrcp.pop %v1053
    %v1055 = vmul.f32 1.0, %v1054
    %v1056 = vtanh.pop %v1042
    %v1057 = vxor.u32 %v1043, 2147483648
    %v1058 = vmul.f32 %v1057, 1.442695
    %v1059 = vpow.pop %v1058
    %v1060 = vadd.f32 %v1059, 1.0
    %v1061 = vrcp.pop %v1060
    %v1062 = vmul.f32 1.0, %v1061
    %v1063 = vmul.f32 %v1055, %v951
    %v1064 = vmul.f32 %v1049, %v1056
    %v1065 = vadd.f32 %v1063, %v1064
    %v1066 = vtanh.pop %v1065
    %v1067 = vmul.f32 %v1062, %v1066
    %s1068 = sadd.s32 %s549, 2
    %v1069 = vstv %s1068
    %vm1070 = vcmp.lt.s32.totalorder %v1069, %v548
    %v1071 = vsel %vm1070, %v1067, %v950
    %v1072 = vsel %vm1070, %v1065, %v951
    %s1073 = scalar_lea.vmem [#allocation2], 96
    %v1074 = vld [vmem:[%s1073] sm:$0xff]
    %v1075 = vld [vmem:[%s1073 + $0x8] sm:$0xff]
    %v1076 = vld [vmem:[%s1073 + $0x10] sm:$0xff]
    %v1077 = vld [vmem:[%s1073 + $0x18] sm:$0xff]
    %v1078 = vpack.c.bf16 %v1071, %v1071
    %1079 = vmatprep.subr.bf16.mxu0 %v654
    %1080 = vmatpush1.bf16.msra.mxu0 %v653
    %1081 = vmatprep.subr.bf16.mxu0 %v658
    %1082 = vmatpush1.bf16.msra.mxu0 %v657
    %1083 = vmatprep.subr.bf16.mxu0 %v662
    %1084 = vmatpush1.bf16.msra.mxu0 %v661
    %1085 = vmatprep.subr.bf16.mxu0 %v666
    %1086 = vmatpush1.bf16.msra.mxu0 %v665
    %1087 = vmatprep.subr.bf16.mxu0 %v670
    %1088 = vmatpush1.bf16.msra.mxu0 %v669
    %1089 = vmatprep.subr.bf16.mxu0 %v674
    %1090 = vmatpush1.bf16.msra.mxu0 %v673
    %1091 = vmatprep.subr.bf16.mxu0 %v678
    %1092 = vmatpush1.bf16.msra.mxu0 %v677
    %1093 = vmatprep.subr.bf16.mxu0 %v682
    %1094 = vmatpush1.bf16.msra.mxu0 %v681
    %1095 = vmatprep.subr.bf16.mxu0 0
    %1096 = vmatpush1.bf16.msra.mxu0 0
    %1097 = vmatprep.subr.bf16.mxu0 0
    %1098 = vmatpush1.bf16.msra.mxu0 0
    %1099 = vmatprep.subr.bf16.mxu0 0
    %1100 = vmatpush1.bf16.msra.mxu0 0
    %1101 = vmatprep.subr.bf16.mxu0 0
    %1102 = vmatpush1.bf16.msra.mxu0 0
    %1103 = vmatprep.subr.bf16.mxu0 0
    %1104 = vmatpush1.bf16.msra.mxu0 0
    %1105 = vmatprep.subr.bf16.mxu0 0
    %1106 = vmatpush1.bf16.msra.mxu0 0
    %1107 = vmatprep.subr.bf16.mxu0 0
    %1108 = vmatpush1.bf16.msra.mxu0 0
    %1109 = vmatprep.subr.bf16.mxu0 0
    %1110 = vmatpush1.bf16.msra.mxu0 0
    %1111 = vmatprep.mubr.bf16.mxu0 0
    %1112 = vmatmul.mubr.bf16.gmra.mrb[0].mxu0 %v1078
    %v1113 = vpop.f32.mrb[0].mxu0
    %v1114 = vadd.f32 0.0, %v1113
    %v1115 = vpop.f32.mrb[0].mxu0
    %v1116 = vadd.f32 0.0, %v1115
    %v1117 = vpop.f32.mrb[0].mxu0
    %v1118 = vpop.f32.mrb[0].mxu0
    %1119 = vdwg.mxu0
    %1120 = vmatprep.subr.bf16.mxu0 %v656
    %1121 = vmatpush1.bf16.msra.mxu0 %v655
    %1122 = vmatprep.subr.bf16.mxu0 %v660
    %1123 = vmatpush1.bf16.msra.mxu0 %v659
    %1124 = vmatprep.subr.bf16.mxu0 %v664
    %1125 = vmatpush1.bf16.msra.mxu0 %v663
    %1126 = vmatprep.subr.bf16.mxu0 %v668
    %1127 = vmatpush1.bf16.msra.mxu0 %v667
    %1128 = vmatprep.subr.bf16.mxu0 %v672
    %1129 = vmatpush1.bf16.msra.mxu0 %v671
    %1130 = vmatprep.subr.bf16.mxu0 %v676
    %1131 = vmatpush1.bf16.msra.mxu0 %v675
    %1132 = vmatprep.subr.bf16.mxu0 %v680
    %1133 = vmatpush1.bf16.msra.mxu0 %v679
    %1134 = vmatprep.subr.bf16.mxu0 %v684
    %1135 = vmatpush1.bf16.msra.mxu0 %v683
    %1136 = vmatprep.subr.bf16.mxu0 0
    %1137 = vmatpush1.bf16.msra.mxu0 0
    %1138 = vmatprep.subr.bf16.mxu0 0
    %1139 = vmatpush1.bf16.msra.mxu0 0
    %1140 = vmatprep.subr.bf16.mxu0 0
    %1141 = vmatpush1.bf16.msra.mxu0 0
    %1142 = vmatprep.subr.bf16.mxu0 0
    %1143 = vmatpush1.bf16.msra.mxu0 0
    %1144 = vmatprep.subr.bf16.mxu0 0
    %1145 = vmatpush1.bf16.msra.mxu0 0
    %1146 = vmatprep.subr.bf16.mxu0 0
    %1147 = vmatpush1.bf16.msra.mxu0 0
    %1148 = vmatprep.subr.bf16.mxu0 0
    %1149 = vmatpush1.bf16.msra.mxu0 0
    %1150 = vmatprep.subr.bf16.mxu0 0
    %1151 = vmatpush1.bf16.msra.mxu0 0
    %1152 = vmatprep.mubr.bf16.mxu0 0
    %1153 = vmatmul.mubr.bf16.gmra.mrb[0].mxu0 %v1078
    %v1154 = vpop.f32.mrb[0].mxu0
    %v1155 = vadd.f32 0.0, %v1154
    %v1156 = vpop.f32.mrb[0].mxu0
    %v1157 = vadd.f32 0.0, %v1156
    %v1158 = vpop.f32.mrb[0].mxu0
    %v1159 = vpop.f32.mrb[0].mxu0
    %1160 = vdwg.mxu0
    %v1161 = vadd.f32 %v1074, %v1114
    %v1162 = vadd.f32 %v1075, %v1116
    %v1163 = vadd.f32 %v1076, %v1155
    %v1164 = vadd.f32 %v1077, %v1157
    %v1165 = vxor.u32 %v1161, 2147483648
    %v1166 = vmul.f32 %v1165, 1.442695
    %v1167 = vpow.pop %v1166
    %v1168 = vadd.f32 %v1167, 1.0
    %v1169 = vrcp.pop %v1168
    %v1170 = vmul.f32 1.0, %v1169
    %v1171 = vxor.u32 %v1162, 2147483648
    %v1172 = vmul.f32 %v1171, 1.442695
    %v1173 = vpow.pop %v1172
    %v1174 = vadd.f32 %v1173, 1.0
    %v1175 = vrcp.pop %v1174
    %v1176 = vmul.f32 1.0, %v1175
    %v1177 = vtanh.pop %v1163
    %v1178 = vxor.u32 %v1164, 2147483648
    %v1179 = vmul.f32 %v1178, 1.442695
    %v1180 = vpow.pop %v1179
    %v1181 = vadd.f32 %v1180, 1.0
    %v1182 = vrcp.pop %v1181
    %v1183 = vmul.f32 1.0, %v1182
    %v1184 = vmul.f32 %v1176, %v1072
    %v1185 = vmul.f32 %v1170, %v1177
    %v1186 = vadd.f32 %v1184, %v1185
    %v1187 = vtanh.pop %v1186
    %v1188 = vmul.f32 %v1183, %v1187
    %s1189 = sadd.s32 %s549, 3
    %v1190 = vstv %s1189
    %vm1191 = vcmp.lt.s32.totalorder %v1190, %v548
    %v1192 = vsel %vm1191, %v1188, %v1071
    %v1193 = vsel %vm1191, %v1186, %v1072
    %s1194 = scalar_lea.vmem [#allocation2], 128
    %v1195 = vld [vmem:[%s1194] sm:$0xff]
    %v1196 = vld [vmem:[%s1194 + $0x8] sm:$0xff]
    %v1197 = vld [vmem:[%s1194 + $0x10] sm:$0xff]
    %v1198 = vld [vmem:[%s1194 + $0x18] sm:$0xff]
    %v1199 = vpack.c.bf16 %v1192, %v1192
    %1200 = vmatprep.subr.bf16.mxu0 %v654
    %1201 = vmatpush1.bf16.msra.mxu0 %v653
    %1202 = vmatprep.subr.bf16.mxu0 %v658
    %1203 = vmatpush1.bf16.msra.mxu0 %v657
    %1204 = vmatprep.subr.bf16.mxu0 %v662
    %1205 = vmatpush1.bf16.msra.mxu0 %v661
    %1206 = vmatprep.subr.bf16.mxu0 %v666
    %1207 = vmatpush1.bf16.msra.mxu0 %v665
    %1208 = vmatprep.subr.bf16.mxu0 %v670
    %1209 = vmatpush1.bf16.msra.mxu0 %v669
    %1210 = vmatprep.subr.bf16.mxu0 %v674
    %1211 = vmatpush1.bf16.msra.mxu0 %v673
    %1212 = vmatprep.subr.bf16.mxu0 %v678
    %1213 = vmatpush1.bf16.msra.mxu0 %v677
    %1214 = vmatprep.subr.bf16.mxu0 %v682
    %1215 = vmatpush1.bf16.msra.mxu0 %v681
    %1216 = vmatprep.subr.bf16.mxu0 0
    %1217 = vmatpush1.bf16.msra.mxu0 0
    %1218 = vmatprep.subr.bf16.mxu0 0
    %1219 = vmatpush1.bf16.msra.mxu0 0
    %1220 = vmatprep.subr.bf16.mxu0 0
    %1221 = vmatpush1.bf16.msra.mxu0 0
    %1222 = vmatprep.subr.bf16.mxu0 0
    %1223 = vmatpush1.bf16.msra.mxu0 0
    %1224 = vmatprep.subr.bf16.mxu0 0
    %1225 = vmatpush1.bf16.msra.mxu0 0
    %1226 = vmatprep.subr.bf16.mxu0 0
    %1227 = vmatpush1.bf16.msra.mxu0 0
    %1228 = vmatprep.subr.bf16.mxu0 0
    %1229 = vmatpush1.bf16.msra.mxu0 0
    %1230 = vmatprep.subr.bf16.mxu0 0
    %1231 = vmatpush1.bf16.msra.mxu0 0
    %1232 = vmatprep.mubr.bf16.mxu0 0
    %1233 = vmatmul.mubr.bf16.gmra.mrb[0].mxu0 %v1199
    %v1234 = vpop.f32.mrb[0].mxu0
    %v1235 = vadd.f32 0.0, %v1234
    %v1236 = vpop.f32.mrb[0].mxu0
    %v1237 = vadd.f32 0.0, %v1236
    %v1238 = vpop.f32.mrb[0].mxu0
    %v1239 = vpop.f32.mrb[0].mxu0
    %1240 = vdwg.mxu0
    %1241 = vmatprep.subr.bf16.mxu0 %v656
    %1242 = vmatpush1.bf16.msra.mxu0 %v655
    %1243 = vmatprep.subr.bf16.mxu0 %v660
    %1244 = vmatpush1.bf16.msra.mxu0 %v659
    %1245 = vmatprep.subr.bf16.mxu0 %v664
    %1246 = vmatpush1.bf16.msra.mxu0 %v663
    %1247 = vmatprep.subr.bf16.mxu0 %v668
    %1248 = vmatpush1.bf16.msra.mxu0 %v667
    %1249 = vmatprep.subr.bf16.mxu0 %v672
    %1250 = vmatpush1.bf16.msra.mxu0 %v671
    %1251 = vmatprep.subr.bf16.mxu0 %v676
    %1252 = vmatpush1.bf16.msra.mxu0 %v675
    %1253 = vmatprep.subr.bf16.mxu0 %v680
    %1254 = vmatpush1.bf16.msra.mxu0 %v679
    %1255 = vmatprep.subr.bf16.mxu0 %v684
    %1256 = vmatpush1.bf16.msra.mxu0 %v683
    %1257 = vmatprep.subr.bf16.mxu0 0
    %1258 = vmatpush1.bf16.msra.mxu0 0
    %1259 = vmatprep.subr.bf16.mxu0 0
    %1260 = vmatpush1.bf16.msra.mxu0 0
    %1261 = vmatprep.subr.bf16.mxu0 0
    %1262 = vmatpush1.bf16.msra.mxu0 0
    %1263 = vmatprep.subr.bf16.mxu0 0
    %1264 = vmatpush1.bf16.msra.mxu0 0
    %1265 = vmatprep.subr.bf16.mxu0 0
    %1266 = vmatpush1.bf16.msra.mxu0 0
    %1267 = vmatprep.subr.bf16.mxu0 0
    %1268 = vmatpush1.bf16.msra.mxu0 0
    %1269 = vmatprep.subr.bf16.mxu0 0
    %1270 = vmatpush1.bf16.msra.mxu0 0
    %1271 = vmatprep.subr.bf16.mxu0 0
    %1272 = vmatpush1.bf16.msra.mxu0 0
    %1273 = vmatprep.mubr.bf16.mxu0 0
    %1274 = vmatmul.mubr.bf16.gmra.mrb[0].mxu0 %v1199
    %v1275 = vpop.f32.mrb[0].mxu0
    %v1276 = vadd.f32 0.0, %v1275
    %v1277 = vpop.f32.mrb[0].mxu0
    %v1278 = vadd.f32 0.0, %v1277
    %v1279 = vpop.f32.mrb[0].mxu0
    %v1280 = vpop.f32.mrb[0].mxu0
    %1281 = vdwg.mxu0
    %v1282 = vadd.f32 %v1195, %v1235
    %v1283 = vadd.f32 %v1196, %v1237
    %v1284 = vadd.f32 %v1197, %v1276
    %v1285 = vadd.f32 %v1198, %v1278
    %v1286 = vxor.u32 %v1282, 2147483648
    %v1287 = vmul.f32 %v1286, 1.442695
    %v1288 = vpow.pop %v1287
    %v1289 = vadd.f32 %v1288, 1.0
    %v1290 = vrcp.pop %v1289
    %v1291 = vmul.f32 1.0, %v1290
    %v1292 = vxor.u32 %v1283, 2147483648
    %v1293 = vmul.f32 %v1292, 1.442695
    %v1294 = vpow.pop %v1293
    %v1295 = vadd.f32 %v1294, 1.0
    %v1296 = vrcp.pop %v1295
    %v1297 = vmul.f32 1.0, %v1296
    %v1298 = vtanh.pop %v1284
    %v1299 = vxor.u32 %v1285, 2147483648
    %v1300 = vmul.f32 %v1299, 1.442695
    %v1301 = vpow.pop %v1300
    %v1302 = vadd.f32 %v1301, 1.0
    %v1303 = vrcp.pop %v1302
    %v1304 = vmul.f32 1.0, %v1303
    %v1305 = vmul.f32 %v1297, %v1193
    %v1306 = vmul.f32 %v1291, %v1298
    %v1307 = vadd.f32 %v1305, %v1306
    %v1308 = vtanh.pop %v1307
    %v1309 = vmul.f32 %v1304, %v1308
    %s1310 = sadd.s32 %s549, 4
    %v1311 = vstv %s1310
    %vm1312 = vcmp.lt.s32.totalorder %v1311, %v548
    %v1313 = vsel %vm1312, %v1309, %v1192
    %v1314 = vsel %vm1312, %v1307, %v1193
    %s1315 = scalar_lea.vmem [#allocation2], 160
    %v1316 = vld [vmem:[%s1315] sm:$0xff]
    %v1317 = vld [vmem:[%s1315 + $0x8] sm:$0xff]
    %v1318 = vld [vmem:[%s1315 + $0x10] sm:$0xff]
    %v1319 = vld [vmem:[%s1315 + $0x18] sm:$0xff]
    %v1320 = vpack.c.bf16 %v1313, %v1313
    %1321 = vmatprep.subr.bf16.mxu0 %v654
    %1322 = vmatpush1.bf16.msra.mxu0 %v653
    %1323 = vmatprep.subr.bf16.mxu0 %v658
    %1324 = vmatpush1.bf16.msra.mxu0 %v657
    %1325 = vmatprep.subr.bf16.mxu0 %v662
    %1326 = vmatpush1.bf16.msra.mxu0 %v661
    %1327 = vmatprep.subr.bf16.mxu0 %v666
    %1328 = vmatpush1.bf16.msra.mxu0 %v665
    %1329 = vmatprep.subr.bf16.mxu0 %v670
    %1330 = vmatpush1.bf16.msra.mxu0 %v669
    %1331 = vmatprep.subr.bf16.mxu0 %v674
    %1332 = vmatpush1.bf16.msra.mxu0 %v673
    %1333 = vmatprep.subr.bf16.mxu0 %v678
    %1334 = vmatpush1.bf16.msra.mxu0 %v677
    %1335 = vmatprep.subr.bf16.mxu0 %v682
    %1336 = vmatpush1.bf16.msra.mxu0 %v681
    %1337 = vmatprep.subr.bf16.mxu0 0
    %1338 = vmatpush1.bf16.msra.mxu0 0
    %1339 = vmatprep.subr.bf16.mxu0 0
    %1340 = vmatpush1.bf16.msra.mxu0 0
    %1341 = vmatprep.subr.bf16.mxu0 0
    %1342 = vmatpush1.bf16.msra.mxu0 0
    %1343 = vmatprep.subr.bf16.mxu0 0
    %1344 = vmatpush1.bf16.msra.mxu0 0
    %1345 = vmatprep.subr.bf16.mxu0 0
    %1346 = vmatpush1.bf16.msra.mxu0 0
    %1347 = vmatprep.subr.bf16.mxu0 0
    %1348 = vmatpush1.bf16.msra.mxu0 0
    %1349 = vmatprep.subr.bf16.mxu0 0
    %1350 = vmatpush1.bf16.msra.mxu0 0
    %1351 = vmatprep.subr.bf16.mxu0 0
    %1352 = vmatpush1.bf16.msra.mxu0 0
    %1353 = vmatprep.mubr.bf16.mxu0 0
    %1354 = vmatmul.mubr.bf16.gmra.mrb[0].mxu0 %v1320
    %v1355 = vpop.f32.mrb[0].mxu0
    %v1356 = vadd.f32 0.0, %v1355
    %v1357 = vpop.f32.mrb[0].mxu0
    %v1358 = vadd.f32 0.0, %v1357
    %v1359 = vpop.f32.mrb[0].mxu0
    %v1360 = vpop.f32.mrb[0].mxu0
    %1361 = vdwg.mxu0
    %1362 = vmatprep.subr.bf16.mxu0 %v656
    %1363 = vmatpush1.bf16.msra.mxu0 %v655
    %1364 = vmatprep.subr.bf16.mxu0 %v660
    %1365 = vmatpush1.bf16.msra.mxu0 %v659
    %1366 = vmatprep.subr.bf16.mxu0 %v664
    %1367 = vmatpush1.bf16.msra.mxu0 %v663
    %1368 = vmatprep.subr.bf16.mxu0 %v668
    %1369 = vmatpush1.bf16.msra.mxu0 %v667
    %1370 = vmatprep.subr.bf16.mxu0 %v672
    %1371 = vmatpush1.bf16.msra.mxu0 %v671
    %1372 = vmatprep.subr.bf16.mxu0 %v676
    %1373 = vmatpush1.bf16.msra.mxu0 %v675
    %1374 = vmatprep.subr.bf16.mxu0 %v680
    %1375 = vmatpush1.bf16.msra.mxu0 %v679
    %1376 = vmatprep.subr.bf16.mxu0 %v684
    %1377 = vmatpush1.bf16.msra.mxu0 %v683
    %1378 = vmatprep.subr.bf16.mxu0 0
    %1379 = vmatpush1.bf16.msra.mxu0 0
    %1380 = vmatprep.subr.bf16.mxu0 0
    %1381 = vmatpush1.bf16.msra.mxu0 0
    %1382 = vmatprep.subr.bf16.mxu0 0
    %1383 = vmatpush1.bf16.msra.mxu0 0
    %1384 = vmatprep.subr.bf16.mxu0 0
    %1385 = vmatpush1.bf16.msra.mxu0 0
    %1386 = vmatprep.subr.bf16.mxu0 0
    %1387 = vmatpush1.bf16.msra.mxu0 0
    %1388 = vmatprep.subr.bf16.mxu0 0
    %1389 = vmatpush1.bf16.msra.mxu0 0
    %1390 = vmatprep.subr.bf16.mxu0 0
    %1391 = vmatpush1.bf16.msra.mxu0 0
    %1392 = vmatprep.subr.bf16.mxu0 0
    %1393 = vmatpush1.bf16.msra.mxu0 0
    %1394 = vmatprep.mubr.bf16.mxu0 0
    %1395 = vmatmul.mubr.bf16.gmra.mrb[0].mxu0 %v1320
    %v1396 = vpop.f32.mrb[0].mxu0
    %v1397 = vadd.f32 0.0, %v1396
    %v1398 = vpop.f32.mrb[0].mxu0
    %v1399 = vadd.f32 0.0, %v1398
    %v1400 = vpop.f32.mrb[0].mxu0
    %v1401 = vpop.f32.mrb[0].mxu0
    %1402 = vdwg.mxu0
    %v1403 = vadd.f32 %v1316, %v1356
    %v1404 = vadd.f32 %v1317, %v1358
    %v1405 = vadd.f32 %v1318, %v1397
    %v1406 = vadd.f32 %v1319, %v1399
    %v1407 = vxor.u32 %v1403, 2147483648
    %v1408 = vmul.f32 %v1407, 1.442695
    %v1409 = vpow.pop %v1408
    %v1410 = vadd.f32 %v1409, 1.0
    %v1411 = vrcp.pop %v1410
    %v1412 = vmul.f32 1.0, %v1411
    %v1413 = vxor.u32 %v1404, 2147483648
    %v1414 = vmul.f32 %v1413, 1.442695
    %v1415 = vpow.pop %v1414
    %v1416 = vadd.f32 %v1415, 1.0
    %v1417 = vrcp.pop %v1416
    %v1418 = vmul.f32 1.0, %v1417
    %v1419 = vtanh.pop %v1405
    %v1420 = vxor.u32 %v1406, 2147483648
    %v1421 = vmul.f32 %v1420, 1.442695
    %v1422 = vpow.pop %v1421
    %v1423 = vadd.f32 %v1422, 1.0
    %v1424 = vrcp.pop %v1423
    %v1425 = vmul.f32 1.0, %v1424
    %v1426 = vmul.f32 %v1418, %v1314
    %v1427 = vmul.f32 %v1412, %v1419
    %v1428 = vadd.f32 %v1426, %v1427
    %v1429 = vtanh.pop %v1428
    %v1430 = vmul.f32 %v1425, %v1429
    %s1431 = sadd.s32 %s549, 5
    %v1432 = vstv %s1431
    %vm1433 = vcmp.lt.s32.totalorder %v1432, %v548
    %v1434 = vsel %vm1433, %v1430, %v1313
    %v1435 = vsel %vm1433, %v1428, %v1314
    %s1436 = scalar_lea.vmem [#allocation2], 192
    %v1437 = vld [vmem:[%s1436] sm:$0xff]
    %v1438 = vld [vmem:[%s1436 + $0x8] sm:$0xff]
    %v1439 = vld [vmem:[%s1436 + $0x10] sm:$0xff]
    %v1440 = vld [vmem:[%s1436 + $0x18] sm:$0xff]
    %v1441 = vpack.c.bf16 %v1434, %v1434
    %1442 = vmatprep.subr.bf16.mxu0 %v654
    %1443 = vmatpush1.bf16.msra.mxu0 %v653
    %1444 = vmatprep.subr.bf16.mxu0 %v658
    %1445 = vmatpush1.bf16.msra.mxu0 %v657
    %1446 = vmatprep.subr.bf16.mxu0 %v662
    %1447 = vmatpush1.bf16.msra.mxu0 %v661
    %1448 = vmatprep.subr.bf16.mxu0 %v666
    %1449 = vmatpush1.bf16.msra.mxu0 %v665
    %1450 = vmatprep.subr.bf16.mxu0 %v670
    %1451 = vmatpush1.bf16.msra.mxu0 %v669
    %1452 = vmatprep.subr.bf16.mxu0 %v674
    %1453 = vmatpush1.bf16.msra.mxu0 %v673
    %1454 = vmatprep.subr.bf16.mxu0 %v678
    %1455 = vmatpush1.bf16.msra.mxu0 %v677
    %1456 = vmatprep.subr.bf16.mxu0 %v682
    %1457 = vmatpush1.bf16.msra.mxu0 %v681
    %1458 = vmatprep.subr.bf16.mxu0 0
    %1459 = vmatpush1.bf16.msra.mxu0 0
    %1460 = vmatprep.subr.bf16.mxu0 0
    %1461 = vmatpush1.bf16.msra.mxu0 0
    %1462 = vmatprep.subr.bf16.mxu0 0
    %1463 = vmatpush1.bf16.msra.mxu0 0
    %1464 = vmatprep.subr.bf16.mxu0 0
    %1465 = vmatpush1.bf16.msra.mxu0 0
    %1466 = vmatprep.subr.bf16.mxu0 0
    %1467 = vmatpush1.bf16.msra.mxu0 0
    %1468 = vmatprep.subr.bf16.mxu0 0
    %1469 = vmatpush1.bf16.msra.mxu0 0
    %1470 = vmatprep.subr.bf16.mxu0 0
    %1471 = vmatpush1.bf16.msra.mxu0 0
    %1472 = vmatprep.subr.bf16.mxu0 0
    %1473 = vmatpush1.bf16.msra.mxu0 0
    %1474 = vmatprep.mubr.bf16.mxu0 0
    %1475 = vmatmul.mubr.bf16.gmra.mrb[0].mxu0 %v1441
    %v1476 = vpop.f32.mrb[0].mxu0
    %v1477 = vadd.f32 0.0, %v1476
    %v1478 = vpop.f32.mrb[0].mxu0
    %v1479 = vadd.f32 0.0, %v1478
    %v1480 = vpop.f32.mrb[0].mxu0
    %v1481 = vpop.f32.mrb[0].mxu0
    %1482 = vdwg.mxu0
    %1483 = vmatprep.subr.bf16.mxu0 %v656
    %1484 = vmatpush1.bf16.msra.mxu0 %v655
    %1485 = vmatprep.subr.bf16.mxu0 %v660
    %1486 = vmatpush1.bf16.msra.mxu0 %v659
    %1487 = vmatprep.subr.bf16.mxu0 %v664
    %1488 = vmatpush1.bf16.msra.mxu0 %v663
    %1489 = vmatprep.subr.bf16.mxu0 %v668
    %1490 = vmatpush1.bf16.msra.mxu0 %v667
    %1491 = vmatprep.subr.bf16.mxu0 %v672
    %1492 = vmatpush1.bf16.msra.mxu0 %v671
    %1493 = vmatprep.subr.bf16.mxu0 %v676
    %1494 = vmatpush1.bf16.msra.mxu0 %v675
    %1495 = vmatprep.subr.bf16.mxu0 %v680
    %1496 = vmatpush1.bf16.msra.mxu0 %v679
    %1497 = vmatprep.subr.bf16.mxu0 %v684
    %1498 = vmatpush1.bf16.msra.mxu0 %v683
    %1499 = vmatprep.subr.bf16.mxu0 0
    %1500 = vmatpush1.bf16.msra.mxu0 0
    %1501 = vmatprep.subr.bf16.mxu0 0
    %1502 = vmatpush1.bf16.msra.mxu0 0
    %1503 = vmatprep.subr.bf16.mxu0 0
    %1504 = vmatpush1.bf16.msra.mxu0 0
    %1505 = vmatprep.subr.bf16.mxu0 0
    %1506 = vmatpush1.bf16.msra.mxu0 0
    %1507 = vmatprep.subr.bf16.mxu0 0
    %1508 = vmatpush1.bf16.msra.mxu0 0
    %1509 = vmatprep.subr.bf16.mxu0 0
    %1510 = vmatpush1.bf16.msra.mxu0 0
    %1511 = vmatprep.subr.bf16.mxu0 0
    %1512 = vmatpush1.bf16.msra.mxu0 0
    %1513 = vmatprep.subr.bf16.mxu0 0
    %1514 = vmatpush1.bf16.msra.mxu0 0
    %1515 = vmatprep.mubr.bf16.mxu0 0
    %1516 = vmatmul.mubr.bf16.gmra.mrb[0].mxu0 %v1441
    %v1517 = vpop.f32.mrb[0].mxu0
    %v1518 = vadd.f32 0.0, %v1517
    %v1519 = vpop.f32.mrb[0].mxu0
    %v1520 = vadd.f32 0.0, %v1519
    %v1521 = vpop.f32.mrb[0].mxu0
    %v1522 = vpop.f32.mrb[0].mxu0
    %1523 = vdwg.mxu0
    %v1524 = vadd.f32 %v1437, %v1477
    %v1525 = vadd.f32 %v1438, %v1479
    %v1526 = vadd.f32 %v1439, %v1518
    %v1527 = vadd.f32 %v1440, %v1520
    %v1528 = vxor.u32 %v1524, 2147483648
    %v1529 = vmul.f32 %v1528, 1.442695
    %v1530 = vpow.pop %v1529
    %v1531 = vadd.f32 %v1530, 1.0
    %v1532 = vrcp.pop %v1531
    %v1533 = vmul.f32 1.0, %v1532
    %v1534 = vxor.u32 %v1525, 2147483648
    %v1535 = vmul.f32 %v1534, 1.442695
    %v1536 = vpow.pop %v1535
    %v1537 = vadd.f32 %v1536, 1.0
    %v1538 = vrcp.pop %v1537
    %v1539 = vmul.f32 1.0, %v1538
    %v1540 = vtanh.pop %v1526
    %v1541 = vxor.u32 %v1527, 2147483648
    %v1542 = vmul.f32 %v1541, 1.442695
    %v1543 = vpow.pop %v1542
    %v1544 = vadd.f32 %v1543, 1.0
    %v1545 = vrcp.pop %v1544
    %v1546 = vmul.f32 1.0, %v1545
    %v1547 = vmul.f32 %v1539, %v1435
    %v1548 = vmul.f32 %v1533, %v1540
    %v1549 = vadd.f32 %v1547, %v1548
    %v1550 = vtanh.pop %v1549
    %v1551 = vmul.f32 %v1546, %v1550
    %s1552 = sadd.s32 %s549, 6
    %v1553 = vstv %s1552
    %vm1554 = vcmp.lt.s32.totalorder %v1553, %v548
    %v1555 = vsel %vm1554, %v1551, %v1434
    %v1556 = vsel %vm1554, %v1549, %v1435
    %s1557 = scalar_lea.vmem [#allocation2], 224
    %v1558 = vld [vmem:[%s1557] sm:$0xff]
    %v1559 = vld [vmem:[%s1557 + $0x8] sm:$0xff]
    %v1560 = vld [vmem:[%s1557 + $0x10] sm:$0xff]
    %v1561 = vld [vmem:[%s1557 + $0x18] sm:$0xff]
    %v1562 = vpack.c.bf16 %v1555, %v1555
    %1563 = vmatprep.subr.bf16.mxu0 %v654
    %1564 = vmatpush1.bf16.msra.mxu0 %v653
    %1565 = vmatprep.subr.bf16.mxu0 %v658
    %1566 = vmatpush1.bf16.msra.mxu0 %v657
    %1567 = vmatprep.subr.bf16.mxu0 %v662
    %1568 = vmatpush1.bf16.msra.mxu0 %v661
    %1569 = vmatprep.subr.bf16.mxu0 %v666
    %1570 = vmatpush1.bf16.msra.mxu0 %v665
    %1571 = vmatprep.subr.bf16.mxu0 %v670
    %1572 = vmatpush1.bf16.msra.mxu0 %v669
    %1573 = vmatprep.subr.bf16.mxu0 %v674
    %1574 = vmatpush1.bf16.msra.mxu0 %v673
    %1575 = vmatprep.subr.bf16.mxu0 %v678
    %1576 = vmatpush1.bf16.msra.mxu0 %v677
    %1577 = vmatprep.subr.bf16.mxu0 %v682
    %1578 = vmatpush1.bf16.msra.mxu0 %v681
    %1579 = vmatprep.subr.bf16.mxu0 0
    %1580 = vmatpush1.bf16.msra.mxu0 0
    %1581 = vmatprep.subr.bf16.mxu0 0
    %1582 = vmatpush1.bf16.msra.mxu0 0
    %1583 = vmatprep.subr.bf16.mxu0 0
    %1584 = vmatpush1.bf16.msra.mxu0 0
    %1585 = vmatprep.subr.bf16.mxu0 0
    %1586 = vmatpush1.bf16.msra.mxu0 0
    %1587 = vmatprep.subr.bf16.mxu0 0
    %1588 = vmatpush1.bf16.msra.mxu0 0
    %1589 = vmatprep.subr.bf16.mxu0 0
    %1590 = vmatpush1.bf16.msra.mxu0 0
    %1591 = vmatprep.subr.bf16.mxu0 0
    %1592 = vmatpush1.bf16.msra.mxu0 0
    %1593 = vmatprep.subr.bf16.mxu0 0
    %1594 = vmatpush1.bf16.msra.mxu0 0
    %1595 = vmatprep.mubr.bf16.mxu0 0
    %1596 = vmatmul.mubr.bf16.gmra.mrb[0].mxu0 %v1562
    %v1597 = vpop.f32.mrb[0].mxu0
    %v1598 = vadd.f32 0.0, %v1597
    %v1599 = vpop.f32.mrb[0].mxu0
    %v1600 = vadd.f32 0.0, %v1599
    %v1601 = vpop.f32.mrb[0].mxu0
    %v1602 = vpop.f32.mrb[0].mxu0
    %1603 = vdwg.mxu0
    %1604 = vmatprep.subr.bf16.mxu0 %v656
    %1605 = vmatpush1.bf16.msra.mxu0 %v655
    %1606 = vmatprep.subr.bf16.mxu0 %v660
    %1607 = vmatpush1.bf16.msra.mxu0 %v659
    %1608 = vmatprep.subr.bf16.mxu0 %v664
    %1609 = vmatpush1.bf16.msra.mxu0 %v663
    %1610 = vmatprep.subr.bf16.mxu0 %v668
    %1611 = vmatpush1.bf16.msra.mxu0 %v667
    %1612 = vmatprep.subr.bf16.mxu0 %v672
    %1613 = vmatpush1.bf16.msra.mxu0 %v671
    %1614 = vmatprep.subr.bf16.mxu0 %v676
    %1615 = vmatpush1.bf16.msra.mxu0 %v675
    %1616 = vmatprep.subr.bf16.mxu0 %v680
    %1617 = vmatpush1.bf16.msra.mxu0 %v679
    %1618 = vmatprep.subr.bf16.mxu0 %v684
    %1619 = vmatpush1.bf16.msra.mxu0 %v683
    %1620 = vmatprep.subr.bf16.mxu0 0
    %1621 = vmatpush1.bf16.msra.mxu0 0
    %1622 = vmatprep.subr.bf16.mxu0 0
    %1623 = vmatpush1.bf16.msra.mxu0 0
    %1624 = vmatprep.subr.bf16.mxu0 0
    %1625 = vmatpush1.bf16.msra.mxu0 0
    %1626 = vmatprep.subr.bf16.mxu0 0
    %1627 = vmatpush1.bf16.msra.mxu0 0
    %1628 = vmatprep.subr.bf16.mxu0 0
    %1629 = vmatpush1.bf16.msra.mxu0 0
    %1630 = vmatprep.subr.bf16.mxu0 0
    %1631 = vmatpush1.bf16.msra.mxu0 0
    %1632 = vmatprep.subr.bf16.mxu0 0
    %1633 = vmatpush1.bf16.msra.mxu0 0
    %1634 = vmatprep.subr.bf16.mxu0 0
    %1635 = vmatpush1.bf16.msra.mxu0 0
    %1636 = vmatprep.mubr.bf16.mxu0 0
    %1637 = vmatmul.mubr.bf16.gmra.mrb[0].mxu0 %v1562
    %v1638 = vpop.f32.mrb[0].mxu0
    %v1639 = vadd.f32 0.0, %v1638
    %v1640 = vpop.f32.mrb[0].mxu0
    %v1641 = vadd.f32 0.0, %v1640
    %v1642 = vpop.f32.mrb[0].mxu0
    %v1643 = vpop.f32.mrb[0].mxu0
    %1644 = vdwg.mxu0
    %v1645 = vadd.f32 %v1558, %v1598
    %v1646 = vadd.f32 %v1559, %v1600
    %v1647 = vadd.f32 %v1560, %v1639
    %v1648 = vadd.f32 %v1561, %v1641
    %v1649 = vxor.u32 %v1645, 2147483648
    %v1650 = vmul.f32 %v1649, 1.442695
    %v1651 = vpow.pop %v1650
    %v1652 = vadd.f32 %v1651, 1.0
    %v1653 = vrcp.pop %v1652
    %v1654 = vmul.f32 1.0, %v1653
    %v1655 = vxor.u32 %v1646, 2147483648
    %v1656 = vmul.f32 %v1655, 1.442695
    %v1657 = vpow.pop %v1656
    %v1658 = vadd.f32 %v1657, 1.0
    %v1659 = vrcp.pop %v1658
    %v1660 = vmul.f32 1.0, %v1659
    %v1661 = vtanh.pop %v1647
    %v1662 = vxor.u32 %v1648, 2147483648
    %v1663 = vmul.f32 %v1662, 1.442695
    %v1664 = vpow.pop %v1663
    %v1665 = vadd.f32 %v1664, 1.0
    %v1666 = vrcp.pop %v1665
    %v1667 = vmul.f32 1.0, %v1666
    %v1668 = vmul.f32 %v1660, %v1556
    %v1669 = vmul.f32 %v1654, %v1661
    %v1670 = vadd.f32 %v1668, %v1669
    %v1671 = vtanh.pop %v1670
    %v1672 = vmul.f32 %v1667, %v1671
    %s1673 = sadd.s32 %s549, 7
    %v1674 = vstv %s1673
    %vm1675 = vcmp.lt.s32.totalorder %v1674, %v548
    %v1676 = vsel %vm1675, %v1672, %v1555
    %v1677 = vsel %vm1675, %v1670, %v1556
    %1678 = vst [vmem:[#allocation3] sm:$0xff] %v1676
    %1679 = vst [vmem:[#allocation4] sm:$0xff] %v1677
    // Predicated region
    $region50: #{tpu_custom_call.1} parent=1 // pred_check
      %p1680 = pneg %p83
    $region51: #{tpu_custom_call.1} parent=1 // pred_check_branch
      %1682 = sbr.rel (%p1680) target = $region53
    $region52: #{tpu_custom_call.1} parent=1 // pred_region
      %v1683 = vld [vmem:[#allocation3] sm:$0xff]
      %v1684 = vld [vmem:[#allocation11] sm:$0xff]
      %v1685 = vld [vmem:[#allocation11 + $0x8] sm:$0xff]
      %v1686 = vld [vmem:[#allocation11 + $0x10] sm:$0xff]
      %v1687 = vld [vmem:[#allocation11 + $0x18] sm:$0xff]
      %v1688 = vld [vmem:[#allocation11 + $0x20] sm:$0xff]
      %v1689 = vld [vmem:[#allocation11 + $0x28] sm:$0xff]
      %v1690 = vld [vmem:[#allocation11 + $0x30] sm:$0xff]
      %v1691 = vld [vmem:[#allocation11 + $0x38] sm:$0xff]
      %v1692 = vld [vmem:[#allocation11 + $0x40] sm:$0xff]
      %v1693 = vld [vmem:[#allocation11 + $0x48] sm:$0xff]
      %v1694 = vld [vmem:[#allocation11 + $0x50] sm:$0xff]
      %v1695 = vld [vmem:[#allocation11 + $0x58] sm:$0xff]
      %v1696 = vld [vmem:[#allocation11 + $0x60] sm:$0xff]
      %v1697 = vld [vmem:[#allocation11 + $0x68] sm:$0xff]
      %v1698 = vld [vmem:[#allocation11 + $0x70] sm:$0xff]
      %v1699 = vld [vmem:[#allocation11 + $0x78] sm:$0xff]
      %v1700 = vld [vmem:[%s6] sm:$0x1]
      %v1702 = vlaneseq
      %v1703 = vshrl.u32 %v1702, 7
      %v1704 = vsub.s32 0, %v1703
      %v1705 = vrot.slane %v1700, %v1704
      %1707 = vmatprep.subr.mxu0 0.0
      %1708 = vmatpush1.msra.mxu0 %v1684
      %1709 = vmatprep.subr.mxu0 0.0
      %1710 = vmatpush1.msra.mxu0 %v1685
      %1711 = vmatprep.subr.mxu0 0.0
      %1712 = vmatpush1.msra.mxu0 %v1686
      %1713 = vmatprep.subr.mxu0 0.0
      %1714 = vmatpush1.msra.mxu0 %v1687
      %1715 = vmatprep.subr.mxu0 0.0
      %1716 = vmatpush1.msra.mxu0 %v1688
      %1717 = vmatprep.subr.mxu0 0.0
      %1718 = vmatpush1.msra.mxu0 %v1689
      %1719 = vmatprep.subr.mxu0 0.0
      %1720 = vmatpush1.msra.mxu0 %v1690
      %1721 = vmatprep.subr.mxu0 0.0
      %1722 = vmatpush1.msra.mxu0 %v1691
      %1723 = vmatprep.subr.mxu0 0.0
      %1724 = vmatpush1.msra.mxu0 %v1692
      %1725 = vmatprep.subr.mxu0 0.0
      %1726 = vmatpush1.msra.mxu0 %v1693
      %1727 = vmatprep.subr.mxu0 0.0
      %1728 = vmatpush1.msra.mxu0 %v1694
      %1729 = vmatprep.subr.mxu0 0.0
      %1730 = vmatpush1.msra.mxu0 %v1695
      %1731 = vmatprep.subr.mxu0 0.0
      %1732 = vmatpush1.msra.mxu0 %v1696
      %1733 = vmatprep.subr.mxu0 0.0
      %1734 = vmatpush1.msra.mxu0 %v1697
      %1735 = vmatprep.subr.mxu0 0.0
      %1736 = vmatpush1.msra.mxu0 %v1698
      %1737 = vmatprep.subr.mxu0 0.0
      %1738 = vmatpush1.msra.mxu0 %v1699
      %1739 = vmatprep.subr.mxu0 0.0
      %1740 = vmatpush1.msra.mxu0 0.0
      %1741 = vmatprep.subr.mxu0 0.0
      %1742 = vmatpush1.msra.mxu0 0.0
      %1743 = vmatprep.subr.mxu0 0.0
      %1744 = vmatpush1.msra.mxu0 0.0
      %1745 = vmatprep.subr.mxu0 0.0
      %1746 = vmatpush1.msra.mxu0 0.0
      %1747 = vmatprep.subr.mxu0 0.0
      %1748 = vmatpush1.msra.mxu0 0.0
      %1749 = vmatprep.subr.mxu0 0.0
      %1750 = vmatpush1.msra.mxu0 0.0
      %1751 = vmatprep.subr.mxu0 0.0
      %1752 = vmatpush1.msra.mxu0 0.0
      %1753 = vmatprep.subr.mxu0 0.0
      %1754 = vmatpush1.msra.mxu0 0.0
      %1755 = vmatprep.subr.mxu0 0.0
      %1756 = vmatpush1.msra.mxu0 0.0
      %1757 = vmatprep.subr.mxu0 0.0
      %1758 = vmatpush1.msra.mxu0 0.0
      %1759 = vmatprep.subr.mxu0 0.0
      %1760 = vmatpush1.msra.mxu0 0.0
      %1761 = vmatprep.subr.mxu0 0.0
      %1762 = vmatpush1.msra.mxu0 0.0
      %1763 = vmatprep.subr.mxu0 0.0
      %1764 = vmatpush1.msra.mxu0 0.0
      %1765 = vmatprep.subr.mxu0 0.0
      %1766 = vmatpush1.msra.mxu0 0.0
      %1767 = vmatprep.subr.mxu0 0.0
      %1768 = vmatpush1.msra.mxu0 0.0
      %1769 = vmatprep.subr.mxu0 0.0
      %1770 = vmatpush1.msra.mxu0 0.0
      %1771 = vmatprep.mubr.f32.mxu0 0.0
      %1772 = vmatmul.mubr.f32.gmra.mrb[0].mxu0 %v1683
      %v1773 = vpop.f32.mrb[0].mxu0
      %v1774 = vadd.f32 %v1705, %v1773
      %v1775 = vpop.f32.mrb[0].mxu0
      %1776 = vdwg.mxu0
      %1777 = vst [vmem:[#allocation13] sm:$0xff] %v1774
    $region53: #{tpu_custom_call.1} parent=1 // pred_fallthru
      _
    // Predicated region
    $region54: #{tpu_custom_call.1} parent=1 // pred_check
      _
    $region55: #{tpu_custom_call.1} parent=1 // pred_check_branch
      %1779 = sbr.rel (0) target = $region57
    $region56: #{tpu_custom_call.1} parent=1 // pred_region
      %s1781 = ssub.s32 128, 128
      %1782 = vsyncadd [#allocation7], %s1781
      %s1784 = sshll.u32 [#allocation13], 4
      %s1785 = int_to_ptr.vmem [resolvable:$true] %s1784
      %1787 = dma.vmem_to_hbm [thread:$0]  %s1785, 128, %s7, [#allocation7]
    $region57: #{tpu_custom_call.1} parent=1 // pred_fallthru
      _
    // Predicated region
    $region58: #{tpu_custom_call.1} parent=1 // pred_check
      _
    $region59: #{tpu_custom_call.1} parent=1 // pred_check_branch
      %1789 = sbr.rel (0) target = $region61
    $region60: #{tpu_custom_call.1} parent=1 // pred_region
      %1790 = dma.done [#allocation7], 128
    $region61: #{tpu_custom_call.1} parent=1 // pred_fallthru
      _
    %1791 = vsyncpa [#allocation6], 1
    %1792 = vsyncpa [#allocation9], 1
    %1793 = vsyncpa [#allocation12], 1
    %1794 = vsyncpa [#allocation7], 1

</llo_original>
